<compile_context>
chip_gen: v7x
topology: tpu7x:2x2x1
jax: 0.10.0
libtpu: 0.0.40
codegen_flags: <defaults>
</compile_context>

<pallas_src>
import functools

import jax
import jax.numpy as jnp
from jax.experimental import pallas as pl
from jax.experimental.pallas import tpu as pltpu


N_TILE = 2048                       # lane tile for the gridded path (real resolutions)
_VMEM_LIMIT = 32 * 1024 * 1024


def _ru(v, m):
    return (v + m - 1) // m * m


# ----------------------------------------------------------------------------
# The single fused Pallas kernel
# ----------------------------------------------------------------------------
def _fused_matmul_kernel(*refs, num_x, has_add):
    """o = max(W @ (x1 [+ x2 + x3]) [+ add] + bias, clamp).

    W, x*  : bf16 MXU operands; accumulation + epilogue stay f32.
    bias   : (M,1) per-output-channel bias (folded BN beta).
    clamp  : (M,1); 0.0 -> ReLU row, -inf -> pass-through row.
    """
    w_ref = refs[0]
    x_refs = refs[1:1 + num_x]
    pos = 1 + num_x
    add_ref = refs[pos] if has_add else None
    pos += int(has_add)
    bias_ref, clamp_ref, o_ref = refs[pos], refs[pos + 1], refs[pos + 2]

    x = x_refs[0][...]
    for r in x_refs[1:]:
        x = x + r[...]                       # VPU add; free next to MXU / DMA
    acc = jnp.dot(w_ref[...], x, preferred_element_type=jnp.float32)
    if has_add:
        acc = acc + add_ref[...]
    acc = acc + bias_ref[...]
    o_ref[...] = jnp.maximum(acc, clamp_ref[...])


def fused_matmul(w, xs, bias, clamp, add=None):
    """out = max(w @ sum(xs) + add + bias[:,None], clamp[:,None]) ; f32 (M,N)."""
    M, K = w.shape
    N = xs[0].shape[1]
    num_x = len(xs)
    has_add = add is not None

    w = w.astype(jnp.bfloat16)
    xs = [x.astype(jnp.bfloat16) for x in xs]
    bias = bias.reshape(M, 1).astype(jnp.float32)
    clamp = clamp.reshape(M, 1).astype(jnp.float32)
    if has_add:
        add = add.astype(jnp.float32)

    kernel = functools.partial(_fused_matmul_kernel, num_x=num_x, has_add=has_add)
    flops = 2 * M * K * N + (num_x - 1) * K * N + (2 + int(has_add)) * M * N
    bytes_accessed = (2 * (M * K + num_x * K * N) + 4 * (2 * M + M * N)
                      + (4 * M * N if has_add else 0))
    cost = pl.CostEstimate(flops=flops, transcendentals=0, bytes_accessed=bytes_accessed)

    if N <= N_TILE:
        # Tiny pixel count: one whole-array block (exempt from (8,128) rule),
        # no host padding, no grid.
        operands = [w] + xs + ([add] if has_add else []) + [bias, clamp]
        return pl.pallas_call(
            kernel,
            out_shape=jax.ShapeDtypeStruct((M, N), jnp.float32),
            in_specs=[pl.BlockSpec(memory_space=pltpu.MemorySpace.VMEM)] * len(operands),
            out_specs=pl.BlockSpec(memory_space=pltpu.MemorySpace.VMEM),
            cost_estimate=cost,
        )(*operands)

    # Real resolutions: tile the lane (pixel) dimension, pipeline, use both
    # v7x TensorCores, keep the working set far below the 64 MiB v7x VMEM.
    n_pad = _ru(N, N_TILE)
    pad = n_pad - N
    if pad:
        xs = [jnp.pad(x, ((0, 0), (0, pad))) for x in xs]
        if has_add:
            add = jnp.pad(add, ((0, 0), (0, pad)))
    grid = (n_pad // N_TILE,)
    in_specs = [pl.BlockSpec((M, K), lambda i: (0, 0))]
    in_specs += [pl.BlockSpec((K, N_TILE), lambda i: (0, i)) for _ in range(num_x)]
    if has_add:
        in_specs.append(pl.BlockSpec((M, N_TILE), lambda i: (0, i)))
    in_specs += [pl.BlockSpec((M, 1), lambda i: (0, 0))] * 2
    out = pl.pallas_call(
        kernel,
        out_shape=jax.ShapeDtypeStruct((M, n_pad), jnp.float32),
        grid=grid,
        in_specs=in_specs,
        out_specs=pl.BlockSpec((M, N_TILE), lambda i: (0, i)),
        compiler_params=pltpu.CompilerParams(
            dimension_semantics=("parallel",),
            vmem_limit_bytes=_VMEM_LIMIT),
        cost_estimate=cost,
    )(w, *xs, *((add,) if has_add else ()), bias, clamp)
    return out[:, :N] if pad else out


def _ref_fused_matmul(w, xs, bias, clamp, add=None):
    """Pure-XLA reference with the same bf16 cast points (for verification)."""
    x = xs[0].astype(jnp.bfloat16)
    for r in xs[1:]:
        x = x + r.astype(jnp.bfloat16)
    acc = jnp.dot(w.astype(jnp.bfloat16), x, preferred_element_type=jnp.float32)
    if add is not None:
        acc = acc + add.astype(jnp.float32)
    acc = acc + bias.reshape(-1, 1).astype(jnp.float32)
    return jnp.maximum(acc, clamp.reshape(-1, 1).astype(jnp.float32))


# ----------------------------------------------------------------------------
# FourierUnit / FFC_BN_ACT stage / FFCResnetBlock (CBHW layout internally)
# ----------------------------------------------------------------------------
def fourier_unit(x, w, bias, mm):
    """x: (C,B,H,W) f32 -> (Cout,B,H,W) f32; fft_norm='ortho', ffc3d=False."""
    C, B, H, W = x.shape
    ff = jnp.fft.rfft2(x, norm="ortho")                        # (C,B,H,Wf) c64
    Wf = ff.shape[-1]
    # torch channel interleave: channel index = 2*c + {0:real, 1:imag}
    st = jnp.stack([ff.real, ff.imag], axis=1).reshape(2 * C, B * H * Wf)
    y = mm(w, [st], bias, jnp.zeros((w.shape[0],), jnp.float32))   # 1x1 conv+BN+ReLU
    Cout = w.shape[0] // 2
    y = y.reshape(Cout, 2, B, H, Wf)
    comp = jax.lax.complex(y[:, 0], y[:, 1])
    return jnp.fft.irfft2(comp, s=(H, W), norm="ortho")


def ffc_bn_act_stage(x_l, x_g, sp, mm):
    """One FFC_BN_ACT stage. x_l, x_g: (8,B,H,W) channel-major (CBHW)."""
    Cl, B, H, W = x_l.shape
    N = B * H * W

    # --- fused 3x3 convs: [BN_l+ReLU](l2l + g2l) rows and scale_g*l2g rows ---
    x_cat = jnp.concatenate([x_l, x_g], axis=0).astype(jnp.bfloat16)    # (16,B,H,W)
    xp = jnp.pad(x_cat, ((0, 0), (0, 0), (1, 1), (1, 1)), mode="reflect")
    patches = jnp.stack(
        [xp[:, :, kh:kh + H, kw:kw + W] for kh in range(3) for kw in range(3)],
        axis=1)
    X3 = patches.reshape(x_cat.shape[0] * 9, N)                         # (144, N) bf16
    # TODO(synk): at large resolutions move this im2col into the kernel as 9
    #             shifted VMEM slices with accumulating dots (saves ~9x HBM).
    Y3 = mm(sp["w3"], [X3], sp["b3"], sp["c3"])                         # (16, N) f32
    out_l = Y3[:Cl]                    # stage x_l output (BN_l + ReLU applied)
    l2g_scaled = Y3[Cl:]               # scale_g * convl2g(x_l), pre-bias/ReLU

    # --- SpectralTransform(x_g): conv1 (1x1) + BN + ReLU ---
    s1_mat = mm(sp["w1"], [x_g.reshape(Cl, N)], sp["b1"],
                jnp.zeros((sp["w1"].shape[0],), jnp.float32))           # (4, N)
    c_half = sp["w1"].shape[0]
    s1 = s1_mat.reshape(c_half, B, H, W)

    # FourierUnit
    fu = fourier_unit(s1, sp["wfu"], sp["bfu"], mm)                     # (4,B,H,W)

    # LFU branch: 2x2 spatial quadrants of channel block 0, then tile back
    xs = s1[: c_half // 4]
    xs = jnp.concatenate(jnp.split(xs, 2, axis=2), axis=0)
    xs = jnp.concatenate(jnp.split(xs, 2, axis=3), axis=0)              # (4,B,H/2,W/2)
    lf = fourier_unit(xs, sp["wlfu"], sp["blfu"], mm)
    lf = jnp.tile(lf, (1, 1, 2, 2))                                     # (4,B,H,W)

    # conv2 over (s1 + fu + lfu) fused with + scale_g*l2g + bias_g + ReLU
    out_g = mm(sp["w2"], [s1_mat, fu.reshape(c_half, N), lf.reshape(c_half, N)],
               sp["b2"], jnp.zeros((Cl,), jnp.float32), add=l2g_scaled)  # (8, N)

    return out_l.reshape(Cl, B, H, W), out_g.reshape(Cl, B, H, W)


def ffc_resnet_block(x_l, x_g, params, mm):
    """Full FFCResnetBlock forward. x_l, x_g: NCHW (B,8,H,W); returns NCHW tuple."""
    xl = jnp.transpose(x_l, (1, 0, 2, 3))
    xg = jnp.transpose(x_g, (1, 0, 2, 3))
    id_l, id_g = xl, xg
    a_l, a_g = ffc_bn_act_stage(xl, xg, params["stage1"], mm)
    b_l, b_g = ffc_bn_act_stage(a_l, a_g, params["stage2"], mm)
    out_l = id_l + b_l
    out_g = id_g + b_g
    return jnp.transpose(out_l, (1, 0, 2, 3)), jnp.transpose(out_g, (1, 0, 2, 3))


# ----------------------------------------------------------------------------
# Parameters: synthetic weights, eval-mode BN folded ONCE at build time
# ----------------------------------------------------------------------------
def _fold_bn(gamma, beta, mean, var, eps=1e-5):
    scale = gamma * jax.lax.rsqrt(var + eps)
    bias = beta - mean * scale
    return scale, bias


def prepare_stage(raw):
    """Fold BN into conv weights and build the fused (16,144) block weight."""
    cl = raw["w_l2l"].shape[0]
    sl, bl = _fold_bn(*raw["bn_l"])
    sg, bg = _fold_bn(*raw["bn_g"])

    w_l2l = raw["w_l2l"].reshape(cl, -1)
    w_g2l = raw["w_g2l"].reshape(cl, -1)
    w_l2g = raw["w_l2g"].reshape(cl, -1)
    top = sl[:, None] * jnp.concatenate([w_l2l, w_g2l], axis=1)      # -> out_xl rows
    bot = sg[:, None] * jnp.concatenate([w_l2g, jnp.zeros_like(w_g2l)], axis=1)
    w3 = jnp.concatenate([top, bot], axis=0).astype(jnp.bfloat16)    # (16, 144)
    b3 = jnp.concatenate([bl, jnp.zeros_like(bl)]).astype(jnp.float32)
    c3 = jnp.concatenate([jnp.zeros_like(bl),
                          jnp.full_like(bl, -jnp.inf)]).astype(jnp.float32)

    s1, b1 = _fold_bn(*raw["conv1_bn"])
    w1 = (s1[:, None] * raw["conv1_w"].reshape(raw["conv1_w"].shape[0], -1)
          ).astype(jnp.bfloat16)
    sfu, bfu = _fold_bn(*raw["fu_bn"])
    wfu = (sfu[:, None] * raw["fu_w"].reshape(raw["fu_w"].shape[0], -1)
           ).astype(jnp.bfloat16)
    slfu, blfu = _fold_bn(*raw["lfu_bn"])
    wlfu = (slfu[:, None] * raw["lfu_w"].reshape(raw["lfu_w"].shape[0], -1)
            ).astype(jnp.bfloat16)
    # BN_g scale folded into conv2; the scaled l2g term is added post-matmul
    w2 = (sg[:, None] * raw["conv2_w"].reshape(raw["conv2_w"].shape[0], -1)
          ).astype(jnp.bfloat16)

    return {"w3": w3, "b3": b3, "c3": c3,
            "w1": w1, "b1": b1.astype(jnp.float32),
            "wfu": wfu, "bfu": bfu.astype(jnp.float32),
            "wlfu": wlfu, "blfu": blfu.astype(jnp.float32),
            "w2": w2, "b2": bg.astype(jnp.float32)}


def make_params(key):
    dim = 16
    cl = cg = dim // 2          # 8 local / 8 global channels
    ch = cg // 2                # 4 channels inside SpectralTransform

    def w(k, shape, s=0.1):
        return (s * jax.random.normal(k, shape)).astype(jnp.float32)

    def bn(k, c):
        kk = jax.random.split(k, 4)
        gamma = 1.0 + 0.1 * jax.random.normal(kk[0], (c,))
        beta = 0.05 * jax.random.normal(kk[1], (c,))
        mean = 0.1 * jax.random.normal(kk[2], (c,))
        var = jax.random.uniform(kk[3], (c,), minval=0.5, maxval=1.5)
        return tuple(a.astype(jnp.float32) for a in (gamma, beta, mean, var))

    def raw_stage(k):
        ks = jax.random.split(k, 12)
        return {
            "w_l2l": w(ks[0], (cl, cl, 3, 3)),
            "w_l2g": w(ks[1], (cg, cl, 3, 3)),
            "w_g2l": w(ks[2], (cl, cg, 3, 3)),
            "bn_l": bn(ks[3], cl),
            "bn_g": bn(ks[4], cg),
            "conv1_w": w(ks[5], (ch, cg, 1, 1)),
            "conv1_bn": bn(ks[6], ch),
            "fu_w": w(ks[7], (2 * ch, 2 * ch, 1, 1)),
            "fu_bn": bn(ks[8], 2 * ch),
            "lfu_w": w(ks[9], (2 * ch, 2 * ch, 1, 1)),
            "lfu_bn": bn(ks[10], 2 * ch),
            "conv2_w": w(ks[11], (cg, ch, 1, 1)),
        }

    k1, k2 = jax.random.split(key)
    return {"stage1": prepare_stage(raw_stage(k1)),
            "stage2": prepare_stage(raw_stage(k2))}


# ----------------------------------------------------------------------------
if __name__ == "__main__":
    key = jax.random.PRNGKey(0)
    k_xl, k_xg, k_p, k_t = jax.random.split(key, 4)

    B, H, W = 2, 16, 16
    x_l = jax.random.normal(k_xl, (B, 8, H, W), dtype=jnp.float32)
    x_g = jax.random.normal(k_xg, (B, 8, H, W), dtype=jnp.float32)
    params = make_params(k_p)

    fwd = jax.jit(functools.partial(ffc_resnet_block, mm=fused_matmul))
    ref = jax.jit(functools.partial(ffc_resnet_block, mm=_ref_fused_matmul))

    out_l, out_g = fwd(x_l, x_g, params)
    out_l = jax.block_until_ready(out_l)
    out_g = jax.block_until_ready(out_g)
    ref_l, ref_g = ref(x_l, x_g, params)

    assert out_l.shape == (B, 8, H, W), out_l.shape
    assert out_g.shape == (B, 8, H, W), out_g.shape
    assert bool(jnp.all(jnp.isfinite(out_l))) and bool(jnp.all(jnp.isfinite(out_g)))
    assert bool(jnp.allclose(out_l, ref_l, atol=2e-2, rtol=2e-2)), \
        float(jnp.max(jnp.abs(out_l - ref_l)))
    assert bool(jnp.allclose(out_g, ref_g, atol=2e-2, rtol=2e-2)), \
        float(jnp.max(jnp.abs(out_g - ref_g)))

    # Smoke-test the lane-tiled grid path used at real resolutions (N > 2048,
    # needs padding, 3 summed mats + post-add, "parallel" grid).
    kk = jax.random.split(k_t, 6)
    wt = 0.1 * jax.random.normal(kk[0], (16, 144), dtype=jnp.float32)
    xts = [jax.random.normal(kk[1 + i], (144, 3000), dtype=jnp.float32)
           for i in range(3)]
    addt = jax.random.normal(kk[4], (16, 3000), dtype=jnp.float32)
    bt = 0.1 * jax.random.normal(kk[5], (16,), dtype=jnp.float32)
    ct = jnp.zeros((16,), jnp.float32)
    got = jax.block_until_ready(fused_matmul(wt, xts, bt, ct, add=addt))
    want = _ref_fused_matmul(wt, xts, bt, ct, add=addt)
    assert got.shape == (16, 3000)
    assert bool(jnp.allclose(got, want, atol=2e-2, rtol=2e-2))

    print("KERNEL_OK")
</pallas_src>

<mosaic_0001>
module attributes {stable_mosaic.version = 11 : i64} {
  func.func @_fused_matmul_kernel(%arg0: memref<4x8xbf16, #tpu.memory_space<vmem>>, %arg1: memref<8x512xbf16, #tpu.memory_space<vmem>>, %arg2: memref<4x1xf32, #tpu.memory_space<vmem>>, %arg3: memref<4x1xf32, #tpu.memory_space<vmem>>, %arg4: memref<4x512xf32, #tpu.memory_space<vmem>>) attributes {dimension_semantics = [], scalar_prefetch = 0 : i64, scratch_operands = 0 : i64, tpu.core_type = #tpu.core_type<tc>} {
    %c0 = arith.constant 0 : index
    %c0_0 = arith.constant 0 : index
    %0 = vector.load %arg1[%c0, %c0_0] : memref<8x512xbf16, #tpu.memory_space<vmem>>, vector<8x512xbf16>
    %c0_1 = arith.constant 0 : index
    %c0_2 = arith.constant 0 : index
    %1 = vector.load %arg0[%c0_1, %c0_2] : memref<4x8xbf16, #tpu.memory_space<vmem>>, vector<4x8xbf16>
    %cst = arith.constant dense<0.000000e+00> : vector<4x512xf32>
    %2 = tpu.matmul %1, %0, %cst {dimension_numbers = #tpu.dot_dimension_numbers<[1], [0], [0], [1], [0, 0, 1, 1], [], []>} : vector<4x8xbf16>, vector<8x512xbf16>, vector<4x512xf32> -> vector<4x512xf32>
    %c0_3 = arith.constant 0 : index
    %c0_4 = arith.constant 0 : index
    %3 = vector.load %arg2[%c0_3, %c0_4] : memref<4x1xf32, #tpu.memory_space<vmem>>, vector<4x1xf32>
    %4 = vector.broadcast %3 : vector<4x1xf32> to vector<4x512xf32>
    %5 = arith.addf %2, %4 : vector<4x512xf32>
    %c0_5 = arith.constant 0 : index
    %c0_6 = arith.constant 0 : index
    %6 = vector.load %arg3[%c0_5, %c0_6] : memref<4x1xf32, #tpu.memory_space<vmem>>, vector<4x1xf32>
    %7 = vector.broadcast %6 : vector<4x1xf32> to vector<4x512xf32>
    %8 = arith.maximumf %5, %7 : vector<4x512xf32>
    %c0_7 = arith.constant 0 : index
    %c0_8 = arith.constant 0 : index
    %9 = vector.load %arg4[%c0_7, %c0_8] : memref<4x512xf32, #tpu.memory_space<vmem>>, vector<4x512xf32>
    tpu.vector_store %arg4[%c0_7, %c0_8], %8 {strides = array<i32>} : memref<4x512xf32, #tpu.memory_space<vmem>>, vector<4x512xf32>,
    return
  }
}

module attributes {stable_mosaic.version = 11 : i64} {
  func.func @_fused_matmul_kernel(%arg0: memref<8x8xbf16, #tpu.memory_space<vmem>>, %arg1: memref<8x80xbf16, #tpu.memory_space<vmem>>, %arg2: memref<8x1xf32, #tpu.memory_space<vmem>>, %arg3: memref<8x1xf32, #tpu.memory_space<vmem>>, %arg4: memref<8x80xf32, #tpu.memory_space<vmem>>) attributes {dimension_semantics = [], scalar_prefetch = 0 : i64, scratch_operands = 0 : i64, tpu.core_type = #tpu.core_type<tc>} {
    %c0 = arith.constant 0 : index
    %c0_0 = arith.constant 0 : index
    %0 = vector.load %arg1[%c0, %c0_0] : memref<8x80xbf16, #tpu.memory_space<vmem>>, vector<8x80xbf16>
    %c0_1 = arith.constant 0 : index
    %c0_2 = arith.constant 0 : index
    %1 = vector.load %arg0[%c0_1, %c0_2] : memref<8x8xbf16, #tpu.memory_space<vmem>>, vector<8x8xbf16>
    %cst = arith.constant dense<0.000000e+00> : vector<8x80xf32>
    %2 = tpu.matmul %1, %0, %cst {dimension_numbers = #tpu.dot_dimension_numbers<[1], [0], [0], [1], [0, 0, 1, 1], [], []>} : vector<8x8xbf16>, vector<8x80xbf16>, vector<8x80xf32> -> vector<8x80xf32>
    %c0_3 = arith.constant 0 : index
    %c0_4 = arith.constant 0 : index
    %3 = vector.load %arg2[%c0_3, %c0_4] : memref<8x1xf32, #tpu.memory_space<vmem>>, vector<8x1xf32>
    %4 = vector.broadcast %3 : vector<8x1xf32> to vector<8x80xf32>
    %5 = arith.addf %2, %4 : vector<8x80xf32>
    %c0_5 = arith.constant 0 : index
    %c0_6 = arith.constant 0 : index
    %6 = vector.load %arg3[%c0_5, %c0_6] : memref<8x1xf32, #tpu.memory_space<vmem>>, vector<8x1xf32>
    %7 = vector.broadcast %6 : vector<8x1xf32> to vector<8x80xf32>
    %8 = arith.maximumf %5, %7 : vector<8x80xf32>
    %c0_7 = arith.constant 0 : index
    %c0_8 = arith.constant 0 : index
    %9 = vector.load %arg4[%c0_7, %c0_8] : memref<8x80xf32, #tpu.memory_space<vmem>>, vector<8x80xf32>
    tpu.vector_store %arg4[%c0_7, %c0_8], %8 {strides = array<i32>} : memref<8x80xf32, #tpu.memory_space<vmem>>, vector<8x80xf32>,
    return
  }
}

module attributes {stable_mosaic.version = 11 : i64} {
  func.func @_fused_matmul_kernel(%arg0: memref<8x8xbf16, #tpu.memory_space<vmem>>, %arg1: memref<8x288xbf16, #tpu.memory_space<vmem>>, %arg2: memref<8x1xf32, #tpu.memory_space<vmem>>, %arg3: memref<8x1xf32, #tpu.memory_space<vmem>>, %arg4: memref<8x288xf32, #tpu.memory_space<vmem>>) attributes {dimension_semantics = [], scalar_prefetch = 0 : i64, scratch_operands = 0 : i64, tpu.core_type = #tpu.core_type<tc>} {
    %c0 = arith.constant 0 : index
    %c0_0 = arith.constant 0 : index
    %0 = vector.load %arg1[%c0, %c0_0] : memref<8x288xbf16, #tpu.memory_space<vmem>>, vector<8x288xbf16>
    %c0_1 = arith.constant 0 : index
    %c0_2 = arith.constant 0 : index
    %1 = vector.load %arg0[%c0_1, %c0_2] : memref<8x8xbf16, #tpu.memory_space<vmem>>, vector<8x8xbf16>
    %cst = arith.constant dense<0.000000e+00> : vector<8x288xf32>
    %2 = tpu.matmul %1, %0, %cst {dimension_numbers = #tpu.dot_dimension_numbers<[1], [0], [0], [1], [0, 0, 1, 1], [], []>} : vector<8x8xbf16>, vector<8x288xbf16>, vector<8x288xf32> -> vector<8x288xf32>
    %c0_3 = arith.constant 0 : index
    %c0_4 = arith.constant 0 : index
    %3 = vector.load %arg2[%c0_3, %c0_4] : memref<8x1xf32, #tpu.memory_space<vmem>>, vector<8x1xf32>
    %4 = vector.broadcast %3 : vector<8x1xf32> to vector<8x288xf32>
    %5 = arith.addf %2, %4 : vector<8x288xf32>
    %c0_5 = arith.constant 0 : index
    %c0_6 = arith.constant 0 : index
    %6 = vector.load %arg3[%c0_5, %c0_6] : memref<8x1xf32, #tpu.memory_space<vmem>>, vector<8x1xf32>
    %7 = vector.broadcast %6 : vector<8x1xf32> to vector<8x288xf32>
    %8 = arith.maximumf %5, %7 : vector<8x288xf32>
    %c0_7 = arith.constant 0 : index
    %c0_8 = arith.constant 0 : index
    %9 = vector.load %arg4[%c0_7, %c0_8] : memref<8x288xf32, #tpu.memory_space<vmem>>, vector<8x288xf32>
    tpu.vector_store %arg4[%c0_7, %c0_8], %8 {strides = array<i32>} : memref<8x288xf32, #tpu.memory_space<vmem>>, vector<8x288xf32>,
    return
  }
}

module attributes {stable_mosaic.version = 11 : i64} {
  func.func @_fused_matmul_kernel(%arg0: memref<16x144xbf16, #tpu.memory_space<vmem>>, %arg1: memref<144x512xbf16, #tpu.memory_space<vmem>>, %arg2: memref<16x1xf32, #tpu.memory_space<vmem>>, %arg3: memref<16x1xf32, #tpu.memory_space<vmem>>, %arg4: memref<16x512xf32, #tpu.memory_space<vmem>>) attributes {dimension_semantics = [], scalar_prefetch = 0 : i64, scratch_operands = 0 : i64, tpu.core_type = #tpu.core_type<tc>} {
    %c0 = arith.constant 0 : index
    %c0_0 = arith.constant 0 : index
    %0 = vector.load %arg1[%c0, %c0_0] : memref<144x512xbf16, #tpu.memory_space<vmem>>, vector<144x512xbf16>
    %c0_1 = arith.constant 0 : index
    %c0_2 = arith.constant 0 : index
    %1 = vector.load %arg0[%c0_1, %c0_2] : memref<16x144xbf16, #tpu.memory_space<vmem>>, vector<16x144xbf16>
    %cst = arith.constant dense<0.000000e+00> : vector<16x512xf32>
    %2 = tpu.matmul %1, %0, %cst {dimension_numbers = #tpu.dot_dimension_numbers<[1], [0], [0], [1], [0, 0, 1, 1], [], []>} : vector<16x144xbf16>, vector<144x512xbf16>, vector<16x512xf32> -> vector<16x512xf32>
    %c0_3 = arith.constant 0 : index
    %c0_4 = arith.constant 0 : index
    %3 = vector.load %arg2[%c0_3, %c0_4] : memref<16x1xf32, #tpu.memory_space<vmem>>, vector<16x1xf32>
    %4 = vector.broadcast %3 : vector<16x1xf32> to vector<16x512xf32>
    %5 = arith.addf %2, %4 : vector<16x512xf32>
    %c0_5 = arith.constant 0 : index
    %c0_6 = arith.constant 0 : index
    %6 = vector.load %arg3[%c0_5, %c0_6] : memref<16x1xf32, #tpu.memory_space<vmem>>, vector<16x1xf32>
    %7 = vector.broadcast %6 : vector<16x1xf32> to vector<16x512xf32>
    %8 = arith.maximumf %5, %7 : vector<16x512xf32>
    %c0_7 = arith.constant 0 : index
    %c0_8 = arith.constant 0 : index
    %9 = vector.load %arg4[%c0_7, %c0_8] : memref<16x512xf32, #tpu.memory_space<vmem>>, vector<16x512xf32>
    tpu.vector_store %arg4[%c0_7, %c0_8], %8 {strides = array<i32>} : memref<16x512xf32, #tpu.memory_space<vmem>>, vector<16x512xf32>,
    return
  }
}

module attributes {stable_mosaic.version = 11 : i64} {
  func.func @_fused_matmul_kernel(%arg0: memref<8x4xbf16, #tpu.memory_space<vmem>>, %arg1: memref<4x512xbf16, #tpu.memory_space<vmem>>, %arg2: memref<4x512xbf16, #tpu.memory_space<vmem>>, %arg3: memref<4x512xbf16, #tpu.memory_space<vmem>>, %arg4: memref<8x512xf32, #tpu.memory_space<vmem>>, %arg5: memref<8x1xf32, #tpu.memory_space<vmem>>, %arg6: memref<8x1xf32, #tpu.memory_space<vmem>>, %arg7: memref<8x512xf32, #tpu.memory_space<vmem>>) attributes {dimension_semantics = [], scalar_prefetch = 0 : i64, scratch_operands = 0 : i64, tpu.core_type = #tpu.core_type<tc>} {
    %c0 = arith.constant 0 : index
    %c0_0 = arith.constant 0 : index
    %0 = vector.load %arg1[%c0, %c0_0] : memref<4x512xbf16, #tpu.memory_space<vmem>>, vector<4x512xbf16>
    %c0_1 = arith.constant 0 : index
    %c0_2 = arith.constant 0 : index
    %1 = vector.load %arg2[%c0_1, %c0_2] : memref<4x512xbf16, #tpu.memory_space<vmem>>, vector<4x512xbf16>
    %2 = arith.addf %0, %1 : vector<4x512xbf16>
    %c0_3 = arith.constant 0 : index
    %c0_4 = arith.constant 0 : index
    %3 = vector.load %arg3[%c0_3, %c0_4] : memref<4x512xbf16, #tpu.memory_space<vmem>>, vector<4x512xbf16>
    %4 = arith.addf %2, %3 : vector<4x512xbf16>
    %c0_5 = arith.constant 0 : index
    %c0_6 = arith.constant 0 : index
    %5 = vector.load %arg0[%c0_5, %c0_6] : memref<8x4xbf16, #tpu.memory_space<vmem>>, vector<8x4xbf16>
    %cst = arith.constant dense<0.000000e+00> : vector<8x512xf32>
    %6 = tpu.matmul %5, %4, %cst {dimension_numbers = #tpu.dot_dimension_numbers<[1], [0], [0], [1], [0, 0, 1, 1], [], []>} : vector<8x4xbf16>, vector<4x512xbf16>, vector<8x512xf32> -> vector<8x512xf32>
    %c0_7 = arith.constant 0 : index
    %c0_8 = arith.constant 0 : index
    %7 = vector.load %arg4[%c0_7, %c0_8] : memref<8x512xf32, #tpu.memory_space<vmem>>, vector<8x512xf32>
    %8 = arith.addf %6, %7 : vector<8x512xf32>
    %c0_9 = arith.constant 0 : index
    %c0_10 = arith.constant 0 : index
    %9 = vector.load %arg5[%c0_9, %c0_10] : memref<8x1xf32, #tpu.memory_space<vmem>>, vector<8x1xf32>
    %10 = vector.broadcast %9 : vector<8x1xf32> to vector<8x512xf32>
    %11 = arith.addf %8, %10 : vector<8x512xf32>
    %c0_11 = arith.constant 0 : index
    %c0_12 = arith.constant 0 : index
    %12 = vector.load %arg6[%c0_11, %c0_12] : memref<8x1xf32, #tpu.memory_space<vmem>>, vector<8x1xf32>
    %13 = vector.broadcast %12 : vector<8x1xf32> to vector<8x512xf32>
    %14 = arith.maximumf %11, %13 : vector<8x512xf32>
    %c0_13 = arith.constant 0 : index
    %c0_14 = arith.constant 0 : index
    %15 = vector.load %arg7[%c0_13, %c0_14] : memref<8x512xf32, #tpu.memory_space<vmem>>, vector<8x512xf32>
    tpu.vector_store %arg7[%c0_13, %c0_14], %14 {strides = array<i32>} : memref<8x512xf32, #tpu.memory_space<vmem>>, vector<8x512xf32>,
    return
  }
}

module attributes {stable_mosaic.version = 11 : i64} {
  func.func @_fused_matmul_kernel(%arg0: memref<4x8xbf16, #tpu.memory_space<vmem>>, %arg1: memref<8x512xbf16, #tpu.memory_space<vmem>>, %arg2: memref<4x1xf32, #tpu.memory_space<vmem>>, %arg3: memref<4x1xf32, #tpu.memory_space<vmem>>, %arg4: memref<4x512xf32, #tpu.memory_space<vmem>>) attributes {dimension_semantics = [], scalar_prefetch = 0 : i64, scratch_operands = 0 : i64, tpu.core_type = #tpu.core_type<tc>} {
    %c0 = arith.constant 0 : index
    %c0_0 = arith.constant 0 : index
    %0 = vector.load %arg1[%c0, %c0_0] : memref<8x512xbf16, #tpu.memory_space<vmem>>, vector<8x512xbf16>
    %c0_1 = arith.constant 0 : index
    %c0_2 = arith.constant 0 : index
    %1 = vector.load %arg0[%c0_1, %c0_2] : memref<4x8xbf16, #tpu.memory_space<vmem>>, vector<4x8xbf16>
    %cst = arith.constant dense<0.000000e+00> : vector<4x512xf32>
    %2 = tpu.matmul %1, %0, %cst {dimension_numbers = #tpu.dot_dimension_numbers<[1], [0], [0], [1], [0, 0, 1, 1], [], []>} : vector<4x8xbf16>, vector<8x512xbf16>, vector<4x512xf32> -> vector<4x512xf32>
    %c0_3 = arith.constant 0 : index
    %c0_4 = arith.constant 0 : index
    %3 = vector.load %arg2[%c0_3, %c0_4] : memref<4x1xf32, #tpu.memory_space<vmem>>, vector<4x1xf32>
    %4 = vector.broadcast %3 : vector<4x1xf32> to vector<4x512xf32>
    %5 = arith.addf %2, %4 : vector<4x512xf32>
    %c0_5 = arith.constant 0 : index
    %c0_6 = arith.constant 0 : index
    %6 = vector.load %arg3[%c0_5, %c0_6] : memref<4x1xf32, #tpu.memory_space<vmem>>, vector<4x1xf32>
    %7 = vector.broadcast %6 : vector<4x1xf32> to vector<4x512xf32>
    %8 = arith.maximumf %5, %7 : vector<4x512xf32>
    %c0_7 = arith.constant 0 : index
    %c0_8 = arith.constant 0 : index
    %9 = vector.load %arg4[%c0_7, %c0_8] : memref<4x512xf32, #tpu.memory_space<vmem>>, vector<4x512xf32>
    tpu.vector_store %arg4[%c0_7, %c0_8], %8 {strides = array<i32>} : memref<4x512xf32, #tpu.memory_space<vmem>>, vector<4x512xf32>,
    return
  }
}

</mosaic_0001>

<llo_original>
// kernel: ffc_resnet_block.11
$region0: #{ffc_resnet_block.11}
  #allocation0 [shape = 'u32[]', space=smem, size = 0x4, offset = 0x4, fixed_abs, tag = 'smem constant byte address 0x4 - core index']
  #allocation1 [shape = 'u32[144,128]{1,0:T(1,128)}', space=vmem, size = 0x12000, scoped, tag = 'internal scratch']
  %s0 = inlined_call_operand.hbm [shape: bf16[4,8], index: 0, kind: input, shape index: {}]
  %s1 = inlined_call_operand.vmem [shape: bf16[8,512], index: 1, kind: input, shape index: {}]
  %s2 = inlined_call_operand.vmem [shape: f32[4,1], index: 2, kind: input, shape index: {}]
  %s3 = inlined_call_operand.vmem [shape: f32[4,1], index: 3, kind: input, shape index: {}]
  %s4 = inlined_call_operand.vmem [shape: f32[4,512], index: 4, kind: output, shape index: {}]
  %s5 = sld [smem:[#allocation0]]
  $region30: #{ffc_resnet_block.11} parent=0
    _
  %s7 = ssub.s32 1, %s5
  %s8 = scalar_select 0, %s7, %s5
  $region1: #{ffc_resnet_block.11} parent=0
    #allocation2 [shape = 'u8[1024]{0}', space=vmem, size = 0x400, scoped, tag = 'input window, operand 0, single buffered']
    #allocation3 [shape = 's32[1]{0}', space=sflag, size = 0x4, scoped, tag = 'scoped memory for ffc_resnet_block.11']
    %9 = vsyncpa [#allocation3], 0
    // Predicated region
    $region2: #{ffc_resnet_block.11} parent=1 // pred_check
      _
    $region3: #{ffc_resnet_block.11} parent=1 // pred_check_branch
      %11 = sbr.rel (0) target = $region5
    $region4: #{ffc_resnet_block.11} parent=1 // pred_region
      %s13 = ssub.s32 32, 32
      %14 = vsyncadd [#allocation3], %s13
      %s16 = sshll.u32 [#allocation2], 4
      %s17 = int_to_ptr.vmem [resolvable:$true] %s16
      %19 = dma.hbm_to_vmem [thread:$0]  %s0, 32, %s17, [#allocation3]
    $region5: #{ffc_resnet_block.11} parent=1 // pred_fallthru
      _
    // Predicated region
    $region6: #{ffc_resnet_block.11} parent=1 // pred_check
      _
    $region7: #{ffc_resnet_block.11} parent=1 // pred_check_branch
      %21 = sbr.rel (0) target = $region9
    $region8: #{ffc_resnet_block.11} parent=1 // pred_region
      _
    $region9: #{ffc_resnet_block.11} parent=1 // pred_fallthru
      _
    // Predicated region
    $region10: #{ffc_resnet_block.11} parent=1 // pred_check
      _
    $region11: #{ffc_resnet_block.11} parent=1 // pred_check_branch
      %23 = sbr.rel (0) target = $region13
    $region12: #{ffc_resnet_block.11} parent=1 // pred_region
      _
    $region13: #{ffc_resnet_block.11} parent=1 // pred_fallthru
      _
    // Predicated region
    $region14: #{ffc_resnet_block.11} parent=1 // pred_check
      _
    $region15: #{ffc_resnet_block.11} parent=1 // pred_check_branch
      %25 = sbr.rel (0) target = $region17
    $region16: #{ffc_resnet_block.11} parent=1 // pred_region
      _
    $region17: #{ffc_resnet_block.11} parent=1 // pred_fallthru
      _
    // Predicated region
    $region18: #{ffc_resnet_block.11} parent=1 // pred_check
      _
    $region19: #{ffc_resnet_block.11} parent=1 // pred_check_branch
      %27 = sbr.rel (0) target = $region21
    $region20: #{ffc_resnet_block.11} parent=1 // pred_region
      %28 = dma.done [#allocation3], 32
    $region21: #{ffc_resnet_block.11} parent=1 // pred_fallthru
      _
    %v30 = vld [vmem:[%s1] sm:$0xff]
    %v31 = vld [vmem:[%s1 + $0x8] sm:$0xff]
    %v32 = vld [vmem:[#allocation2] sm:$0x3]
    %v33 = vld [vmem:[%s2] sm:$0xf]
    %35 = vset.pattern.permute.xlu0 0
    %36 = vperm.xlu0 %35, %v33
    %v37 = vpop.permute.xlu0 %36
    %v41 = vunpack.c.l.b16 %v30
    %v42 = vunpack.c.h.b16 %v30
    %v43 = vunpack.c.l.b16 %v31
    %v44 = vunpack.c.h.b16 %v31
    %v45 = vpack.c.b16 %v41, %v41
    %v46 = vpack.c.b16 %v42, %v42
    %v47 = vpack.c.b16 %v43, %v43
    %v48 = vpack.c.b16 %v44, %v44
    %vm49 = vcmask 64512
    %v51 = vsel %vm49, %v32, 0
    %vm53 = vcmask 1043456
    %v55 = vsel %vm53, %v45, 0
    %v58 = vsel %vm53, %v46, 0
    %v61 = vsel %vm53, %v47, 0
    %v64 = vsel %vm53, %v48, 0
    %66 = vmatprep.subr.bf16.mxu0 %v58
    %67 = vmatpush1.bf16.msra.mxu0 %v55
    %68 = vmatprep.subr.bf16.mxu0 0
    %69 = vmatpush1.bf16.msra.mxu0 0
    %70 = vmatprep.subr.bf16.mxu0 0
    %71 = vmatpush1.bf16.msra.mxu0 0
    %72 = vmatprep.subr.bf16.mxu0 0
    %73 = vmatpush1.bf16.msra.mxu0 0
    %74 = vmatprep.subr.bf16.mxu0 0
    %75 = vmatpush1.bf16.msra.mxu0 0
    %76 = vmatprep.subr.bf16.mxu0 0
    %77 = vmatpush1.bf16.msra.mxu0 0
    %78 = vmatprep.subr.bf16.mxu0 0
    %79 = vmatpush1.bf16.msra.mxu0 0
    %80 = vmatprep.subr.bf16.mxu0 0
    %81 = vmatpush1.bf16.msra.mxu0 0
    %82 = vmatprep.subr.bf16.mxu0 0
    %83 = vmatpush1.bf16.msra.mxu0 0
    %84 = vmatprep.subr.bf16.mxu0 0
    %85 = vmatpush1.bf16.msra.mxu0 0
    %86 = vmatprep.subr.bf16.mxu0 0
    %87 = vmatpush1.bf16.msra.mxu0 0
    %88 = vmatprep.subr.bf16.mxu0 0
    %89 = vmatpush1.bf16.msra.mxu0 0
    %90 = vmatprep.subr.bf16.mxu0 0
    %91 = vmatpush1.bf16.msra.mxu0 0
    %92 = vmatprep.subr.bf16.mxu0 0
    %93 = vmatpush1.bf16.msra.mxu0 0
    %94 = vmatprep.subr.bf16.mxu0 0
    %95 = vmatpush1.bf16.msra.mxu0 0
    %96 = vmatprep.subr.bf16.mxu0 0
    %97 = vmatpush1.bf16.msra.mxu0 0
    %98 = vmatprep.mubr.bf16.mxu0 0
    %99 = vmatmul.mubr.bf16.gmra.mrb[0].mxu0 %v51
    %v100 = vpop.f32.mrb[0].mxu0
    %v101 = vadd.f32 %v37, %v100
    %v102 = vpop.f32.mrb[0].mxu0
    %v103 = vadd.f32 %v37, %v102
    %v104 = vpop.f32.mrb[0].mxu0
    %v105 = vpop.f32.mrb[0].mxu0
    %106 = vdwg.mxu0
    %107 = vmatprep.subr.bf16.mxu0 %v64
    %108 = vmatpush1.bf16.msra.mxu0 %v61
    %109 = vmatprep.subr.bf16.mxu0 0
    %110 = vmatpush1.bf16.msra.mxu0 0
    %111 = vmatprep.subr.bf16.mxu0 0
    %112 = vmatpush1.bf16.msra.mxu0 0
    %113 = vmatprep.subr.bf16.mxu0 0
    %114 = vmatpush1.bf16.msra.mxu0 0
    %115 = vmatprep.subr.bf16.mxu0 0
    %116 = vmatpush1.bf16.msra.mxu0 0
    %117 = vmatprep.subr.bf16.mxu0 0
    %118 = vmatpush1.bf16.msra.mxu0 0
    %119 = vmatprep.subr.bf16.mxu0 0
    %120 = vmatpush1.bf16.msra.mxu0 0
    %121 = vmatprep.subr.bf16.mxu0 0
    %122 = vmatpush1.bf16.msra.mxu0 0
    %123 = vmatprep.subr.bf16.mxu0 0
    %124 = vmatpush1.bf16.msra.mxu0 0
    %125 = vmatprep.subr.bf16.mxu0 0
    %126 = vmatpush1.bf16.msra.mxu0 0
    %127 = vmatprep.subr.bf16.mxu0 0
    %128 = vmatpush1.bf16.msra.mxu0 0
    %129 = vmatprep.subr.bf16.mxu0 0
    %130 = vmatpush1.bf16.msra.mxu0 0
    %131 = vmatprep.subr.bf16.mxu0 0
    %132 = vmatpush1.bf16.msra.mxu0 0
    %133 = vmatprep.subr.bf16.mxu0 0
    %134 = vmatpush1.bf16.msra.mxu0 0
    %135 = vmatprep.subr.bf16.mxu0 0
    %136 = vmatpush1.bf16.msra.mxu0 0
    %137 = vmatprep.subr.bf16.mxu0 0
    %138 = vmatpush1.bf16.msra.mxu0 0
    %139 = vmatprep.mubr.bf16.mxu0 0
    %140 = vmatmul.mubr.bf16.gmra.mrb[0].mxu0 %v51
    %v141 = vpop.f32.mrb[0].mxu0
    %v142 = vadd.f32 %v37, %v141
    %v143 = vpop.f32.mrb[0].mxu0
    %v144 = vadd.f32 %v37, %v143
    %v145 = vpop.f32.mrb[0].mxu0
    %v146 = vpop.f32.mrb[0].mxu0
    %147 = vdwg.mxu0
    %v148 = vld [vmem:[%s3] sm:$0xf]
    %150 = vset.pattern.permute.xlu0 0
    %151 = vperm.xlu0 %150, %v148
    %v152 = vpop.permute.xlu0 %151
    %v154 = vmax.f32 %v101, %v152
    %v155 = vmax.f32 %v103, %v152
    %v156 = vmax.f32 %v142, %v152
    %v157 = vmax.f32 %v144, %v152
    %v162 = vcombine.low %v154, %v155
    %v163 = vcombine.low %v156, %v157
    %166 = vst [vmem:[%s4] sm:$0xff] %v162
    %167 = vst [vmem:[%s4 + $0x8] sm:$0xff] %v163
    // Predicated region
    $region22: #{ffc_resnet_block.11} parent=1 // pred_check
      _
    $region23: #{ffc_resnet_block.11} parent=1 // pred_check_branch
      %169 = sbr.rel (0) target = $region25
    $region24: #{ffc_resnet_block.11} parent=1 // pred_region
      _
    $region25: #{ffc_resnet_block.11} parent=1 // pred_fallthru
      _
    // Predicated region
    $region26: #{ffc_resnet_block.11} parent=1 // pred_check
      _
    $region27: #{ffc_resnet_block.11} parent=1 // pred_check_branch
      %171 = sbr.rel (0) target = $region29
    $region28: #{ffc_resnet_block.11} parent=1 // pred_region
      _
    $region29: #{ffc_resnet_block.11} parent=1 // pred_fallthru
      _
    %172 = vsyncpa [#allocation3], 1

// kernel: ffc_resnet_block.13
$region0: #{ffc_resnet_block.13}
  #allocation0 [shape = 'u32[]', space=smem, size = 0x4, offset = 0x4, fixed_abs, tag = 'smem constant byte address 0x4 - core index']
  #allocation1 [shape = 'u32[144,128]{1,0:T(1,128)}', space=vmem, size = 0x12000, scoped, tag = 'internal scratch']
  %s0 = inlined_call_operand.vmem [shape: bf16[8,8], index: 0, kind: input, shape index: {}]
  %s1 = inlined_call_operand.vmem [shape: bf16[8,80], index: 1, kind: input, shape index: {}]
  %s2 = inlined_call_operand.vmem [shape: f32[8,1], index: 2, kind: input, shape index: {}]
  %s3 = inlined_call_operand.vmem [shape: f32[8,1], index: 3, kind: input, shape index: {}]
  %s4 = inlined_call_operand.vmem [shape: f32[8,80], index: 4, kind: output, shape index: {}]
  %s5 = sld [smem:[#allocation0]]
  $region26: #{ffc_resnet_block.13} parent=0
    _
  %s7 = ssub.s32 1, %s5
  %s8 = scalar_select 0, %s7, %s5
  // Predicated region
  $region2: #{ffc_resnet_block.13} parent=0 // pred_check
    _
  $region3: #{ffc_resnet_block.13} parent=0 // pred_check_branch
    %10 = sbr.rel (0) target = $region5
  $region4: #{ffc_resnet_block.13} parent=0 // pred_region
    _
  $region5: #{ffc_resnet_block.13} parent=0 // pred_fallthru
    _
  // Predicated region
  $region6: #{ffc_resnet_block.13} parent=0 // pred_check
    _
  $region7: #{ffc_resnet_block.13} parent=0 // pred_check_branch
    %12 = sbr.rel (0) target = $region9
  $region8: #{ffc_resnet_block.13} parent=0 // pred_region
    _
  $region9: #{ffc_resnet_block.13} parent=0 // pred_fallthru
    _
  // Predicated region
  $region10: #{ffc_resnet_block.13} parent=0 // pred_check
    _
  $region11: #{ffc_resnet_block.13} parent=0 // pred_check_branch
    %14 = sbr.rel (0) target = $region13
  $region12: #{ffc_resnet_block.13} parent=0 // pred_region
    _
  $region13: #{ffc_resnet_block.13} parent=0 // pred_fallthru
    _
  // Predicated region
  $region14: #{ffc_resnet_block.13} parent=0 // pred_check
    _
  $region15: #{ffc_resnet_block.13} parent=0 // pred_check_branch
    %16 = sbr.rel (0) target = $region17
  $region16: #{ffc_resnet_block.13} parent=0 // pred_region
    _
  $region17: #{ffc_resnet_block.13} parent=0 // pred_fallthru
    _
  %v18 = vld [vmem:[%s1] sm:$0xf]
  %v19 = vld [vmem:[%s0] sm:$0xf]
  %v20 = vld [vmem:[%s2] sm:$0xff]
  %22 = vset.pattern.permute.xlu0 0
  %23 = vperm.xlu0 %22, %v20
  %v24 = vpop.permute.xlu0 %23
  %vm26 = vcmask 64512
  %v28 = vsel %vm26, %v19, 0
  %vm30 = vcmask 1043456
  %v32 = vsel %vm30, %v18, 0
  %34 = vmatprep.subr.bf16.mxu0 0
  %35 = vmatpush1.bf16.msra.mxu0 %v32
  %36 = vmatprep.subr.bf16.mxu0 0
  %37 = vmatpush1.bf16.msra.mxu0 0
  %38 = vmatprep.subr.bf16.mxu0 0
  %39 = vmatpush1.bf16.msra.mxu0 0
  %40 = vmatprep.subr.bf16.mxu0 0
  %41 = vmatpush1.bf16.msra.mxu0 0
  %42 = vmatprep.subr.bf16.mxu0 0
  %43 = vmatpush1.bf16.msra.mxu0 0
  %44 = vmatprep.subr.bf16.mxu0 0
  %45 = vmatpush1.bf16.msra.mxu0 0
  %46 = vmatprep.subr.bf16.mxu0 0
  %47 = vmatpush1.bf16.msra.mxu0 0
  %48 = vmatprep.subr.bf16.mxu0 0
  %49 = vmatpush1.bf16.msra.mxu0 0
  %50 = vmatprep.subr.bf16.mxu0 0
  %51 = vmatpush1.bf16.msra.mxu0 0
  %52 = vmatprep.subr.bf16.mxu0 0
  %53 = vmatpush1.bf16.msra.mxu0 0
  %54 = vmatprep.subr.bf16.mxu0 0
  %55 = vmatpush1.bf16.msra.mxu0 0
  %56 = vmatprep.subr.bf16.mxu0 0
  %57 = vmatpush1.bf16.msra.mxu0 0
  %58 = vmatprep.subr.bf16.mxu0 0
  %59 = vmatpush1.bf16.msra.mxu0 0
  %60 = vmatprep.subr.bf16.mxu0 0
  %61 = vmatpush1.bf16.msra.mxu0 0
  %62 = vmatprep.subr.bf16.mxu0 0
  %63 = vmatpush1.bf16.msra.mxu0 0
  %64 = vmatprep.subr.bf16.mxu0 0
  %65 = vmatpush1.bf16.msra.mxu0 0
  %66 = vmatprep.mubr.bf16.mxu0 0
  %67 = vmatmul.mubr.bf16.gmra.mrb[0].mxu0 %v28
  %v68 = vpop.f32.mrb[0].mxu0
  %v69 = vadd.f32 %v24, %v68
  %v70 = vpop.f32.mrb[0].mxu0
  %v71 = vpop.f32.mrb[0].mxu0
  %v72 = vpop.f32.mrb[0].mxu0
  %73 = vdwg.mxu0
  %v74 = vld [vmem:[%s3] sm:$0xff]
  %76 = vset.pattern.permute.xlu0 0
  %77 = vperm.xlu0 %76, %v74
  %v78 = vpop.permute.xlu0 %77
  %v80 = vmax.f32 %v69, %v78
  %vm81 = vcmask 654336
  %82 = vst.msk [vmem:[%s4] sm:$0xff] %vm81, %v80
  // Predicated region
  $region18: #{ffc_resnet_block.13} parent=0 // pred_check
    _
  $region19: #{ffc_resnet_block.13} parent=0 // pred_check_branch
    %84 = sbr.rel (0) target = $region21
  $region20: #{ffc_resnet_block.13} parent=0 // pred_region
    _
  $region21: #{ffc_resnet_block.13} parent=0 // pred_fallthru
    _
  // Predicated region
  $region22: #{ffc_resnet_block.13} parent=0 // pred_check
    _
  $region23: #{ffc_resnet_block.13} parent=0 // pred_check_branch
    %86 = sbr.rel (0) target = $region25
  $region24: #{ffc_resnet_block.13} parent=0 // pred_region
    _
  $region25: #{ffc_resnet_block.13} parent=0 // pred_fallthru
    _

// kernel: reverse.11
$region0: #{reverse.11}
  %s0 = inlined_call_operand.vmem [shape: f32[4,2,8,3], index: 0, kind: input, shape index: {}]
  %s1 = inlined_call_operand.vmem [shape: f32[4,2,8,3], index: 1, kind: output, shape index: {}]
  $region1: #{reverse.11} parent=0
    #allocation0 [shape = 'u8[65536]{0}', space=vmem, size = 0x10000, scoped, tag = 'operand span for operand 0']
    #allocation1 [shape = 'u8[32768]{0}', space=vmem, size = 0x8000, scoped, tag = 'packed  for operand 0']
    #allocation2 [shape = 'u8[32768]{0}', space=vmem, size = 0x8000, scoped, tag = 'operand span for operand 1']
    #allocation3 [shape = 'u8[16384]{0}', space=vmem, size = 0x4000, scoped, tag = 'packed  for operand 1']
    %s2 = scalar_lea.vmem [#allocation1], 4
    // Predicated region
    $region2: #{reverse.11} parent=1 // pred_check
      _
    $region3: #{reverse.11} parent=1 // pred_check_branch
      %4 = sbr.rel (0) target = $region5
    $region4: #{reverse.11} parent=1 // pred_region
      // Predicated region
      $region6: #{reverse.11} parent=4 // pred_check
        _
      $region7: #{reverse.11} parent=4 // pred_check_branch
        %6 = sbr.rel target = $region9
      $region8: #{reverse.11} parent=4 // pred_region
        // Predicated region
        $region21: #{reverse.11} parent=8 // pred_check
          _
        $region22: #{reverse.11} parent=8 // pred_check_branch
          %35 = sbr.rel (0) target = $region24
        $region23: #{reverse.11} parent=8 // pred_region
          loop: start=0, step=1, limit=1
          $region25: #{reverse.11} parent=23 // loop_pre_header
            _
          $region26: #{reverse.11} parent=23 // loop_header
            %s37 = sphi 0, %s41
            %p38 = scmp.ge.s32.totalorder %s37, 1
            %s42 = sphi %s0, %s0
            %s43 = sphi %s2, %s2
          $region27: #{reverse.11} parent=23 // loop_header_branch
            %40 = sbr.rel (%p38) target = $region31
          $region28: #{reverse.11} parent=23 // loop_body
            _
          $region29: #{reverse.11} parent=23 // loop_footer
            %s41 = sadd.s32 1, %s37
          $region30: #{reverse.11} parent=23 // loop_footer_branch
            %36 = sbr.rel target = $region26
          $region31: #{reverse.11} parent=23 // loop_exit
            _
          loop: start=0, step=1, limit=1
          $region32: #{reverse.11} parent=23 // loop_pre_header
            _
          $region33: #{reverse.11} parent=23 // loop_header
            %s46 = sphi 0, %s50
            %p47 = scmp.ge.s32.totalorder %s46, 1
            %s51 = sphi %s0, %s0
            %s52 = sphi %s2, %s2
          $region34: #{reverse.11} parent=23 // loop_header_branch
            %49 = sbr.rel (%p47) target = $region38
          $region35: #{reverse.11} parent=23 // loop_body
            %v53 = vld [vmem:[%s51] sm:$0xf]
            %54 = vst [vmem:[%s52] sm:$0xf] %v53
            %v55 = vld [vmem:[%s51 + $0x4] sm:$0xf]
            %56 = vst [vmem:[%s52 + $0x8] sm:$0xf] %v55
            %v57 = vld [vmem:[%s51 + $0x8] sm:$0xf]
            %58 = vst [vmem:[%s52 + $0x10] sm:$0xf] %v57
            %v59 = vld [vmem:[%s51 + $0xc] sm:$0xf]
            %60 = vst [vmem:[%s52 + $0x18] sm:$0xf] %v59
            %v61 = vld [vmem:[%s51 + $0x10] sm:$0xf]
            %62 = vst [vmem:[%s52 + $0x20] sm:$0xf] %v61
            %v63 = vld [vmem:[%s51 + $0x14] sm:$0xf]
            %64 = vst [vmem:[%s52 + $0x28] sm:$0xf] %v63
            %v65 = vld [vmem:[%s51 + $0x18] sm:$0xf]
            %66 = vst [vmem:[%s52 + $0x30] sm:$0xf] %v65
            %v67 = vld [vmem:[%s51 + $0x1c] sm:$0xf]
            %68 = vst [vmem:[%s52 + $0x38] sm:$0xf] %v67
          $region36: #{reverse.11} parent=23 // loop_footer
            %s50 = sadd.s32 1, %s46
          $region37: #{reverse.11} parent=23 // loop_footer_branch
            %45 = sbr.rel target = $region33
          $region38: #{reverse.11} parent=23 // loop_exit
            _
        $region24: #{reverse.11} parent=8 // pred_fallthru
          _
      $region9: #{reverse.11} parent=4 // pred_fallthru
        _
      // Predicated region
      $region10: #{reverse.11} parent=4 // pred_check
        _
      $region11: #{reverse.11} parent=4 // pred_check_branch
        %8 = sbr.rel (0) target = $region13
      $region12: #{reverse.11} parent=4 // pred_region
        loop: start=0, step=1, limit=1
        $region14: #{reverse.11} parent=12 // loop_pre_header
          _
        $region15: #{reverse.11} parent=12 // loop_header
          %s11 = sphi 0, %s15
          %p12 = scmp.ge.s32.totalorder %s11, 1
          %s16 = sphi %s0, %s0
          %s17 = sphi %s2, %s2
        $region16: #{reverse.11} parent=12 // loop_header_branch
          %14 = sbr.rel (%p12) target = $region20
        $region17: #{reverse.11} parent=12 // loop_body
          %v18 = vld [vmem:[%s16] sm:$0xf]
          %19 = vst [vmem:[%s17] sm:$0xf] %v18
          %v20 = vld [vmem:[%s16 + $0x4] sm:$0xf]
          %21 = vst [vmem:[%s17 + $0x8] sm:$0xf] %v20
          %v22 = vld [vmem:[%s16 + $0x8] sm:$0xf]
          %23 = vst [vmem:[%s17 + $0x10] sm:$0xf] %v22
          %v24 = vld [vmem:[%s16 + $0xc] sm:$0xf]
          %25 = vst [vmem:[%s17 + $0x18] sm:$0xf] %v24
          %v26 = vld [vmem:[%s16 + $0x10] sm:$0xf]
          %27 = vst [vmem:[%s17 + $0x20] sm:$0xf] %v26
          %v28 = vld [vmem:[%s16 + $0x14] sm:$0xf]
          %29 = vst [vmem:[%s17 + $0x28] sm:$0xf] %v28
          %v30 = vld [vmem:[%s16 + $0x18] sm:$0xf]
          %31 = vst [vmem:[%s17 + $0x30] sm:$0xf] %v30
          %v32 = vld [vmem:[%s16 + $0x1c] sm:$0xf]
          %33 = vst [vmem:[%s17 + $0x38] sm:$0xf] %v32
        $region18: #{reverse.11} parent=12 // loop_footer
          %s15 = sadd.s32 1, %s11
        $region19: #{reverse.11} parent=12 // loop_footer_branch
          %10 = sbr.rel target = $region15
        $region20: #{reverse.11} parent=12 // loop_exit
          _
      $region13: #{reverse.11} parent=4 // pred_fallthru
        _
    $region5: #{reverse.11} parent=1 // pred_fallthru
      _
    %69 = vnop
    %s71 = sshllo.u32 0, 4
    %s72 = smul.addr 4, 15
    %s73 = scalar_lea.vmem [#allocation1], %s72
    %v74 = vld [vmem:[%s73] sm:%s71]
    %s75 = scalar_lea.vmem [#allocation0], 120
    %76 = vst [vmem:[%s75] sm:%s71] %v74
    %s77 = smul.addr 4, 14
    %s78 = scalar_lea.vmem [#allocation1], %s77
    %v79 = vld [vmem:[%s78] sm:%s71]
    %s80 = scalar_lea.vmem [#allocation0], 112
    %81 = vst [vmem:[%s80] sm:%s71] %v79
    %s82 = smul.addr 4, 13
    %s83 = scalar_lea.vmem [#allocation1], %s82
    %v84 = vld [vmem:[%s83] sm:%s71]
    %s85 = scalar_lea.vmem [#allocation0], 104
    %86 = vst [vmem:[%s85] sm:%s71] %v84
    %s87 = smul.addr 4, 12
    %s88 = scalar_lea.vmem [#allocation1], %s87
    %v89 = vld [vmem:[%s88] sm:%s71]
    %s90 = scalar_lea.vmem [#allocation0], 96
    %91 = vst [vmem:[%s90] sm:%s71] %v89
    %s92 = smul.addr 4, 11
    %s93 = scalar_lea.vmem [#allocation1], %s92
    %v94 = vld [vmem:[%s93] sm:%s71]
    %s95 = scalar_lea.vmem [#allocation0], 88
    %96 = vst [vmem:[%s95] sm:%s71] %v94
    %s97 = smul.addr 4, 10
    %s98 = scalar_lea.vmem [#allocation1], %s97
    %v99 = vld [vmem:[%s98] sm:%s71]
    %s100 = scalar_lea.vmem [#allocation0], 80
    %101 = vst [vmem:[%s100] sm:%s71] %v99
    %s102 = smul.addr 4, 9
    %s103 = scalar_lea.vmem [#allocation1], %s102
    %v104 = vld [vmem:[%s103] sm:%s71]
    %s105 = scalar_lea.vmem [#allocation0], 72
    %106 = vst [vmem:[%s105] sm:%s71] %v104
    %s107 = smul.addr 4, 8
    %s108 = scalar_lea.vmem [#allocation1], %s107
    %v109 = vld [vmem:[%s108] sm:%s71]
    %s110 = scalar_lea.vmem [#allocation0], 64
    %111 = vst [vmem:[%s110] sm:%s71] %v109
    %s112 = smul.addr 4, 7
    %s113 = scalar_lea.vmem [#allocation1], %s112
    %v114 = vld [vmem:[%s113] sm:%s71]
    %s115 = scalar_lea.vmem [#allocation0], 56
    %116 = vst [vmem:[%s115] sm:%s71] %v114
    %s117 = smul.addr 4, 6
    %s118 = scalar_lea.vmem [#allocation1], %s117
    %v119 = vld [vmem:[%s118] sm:%s71]
    %s120 = scalar_lea.vmem [#allocation0], 48
    %121 = vst [vmem:[%s120] sm:%s71] %v119
    %s122 = smul.addr 4, 5
    %s123 = scalar_lea.vmem [#allocation1], %s122
    %v124 = vld [vmem:[%s123] sm:%s71]
    %s125 = scalar_lea.vmem [#allocation0], 40
    %126 = vst [vmem:[%s125] sm:%s71] %v124
    %s127 = smul.addr 4, 4
    %s128 = scalar_lea.vmem [#allocation1], %s127
    %v129 = vld [vmem:[%s128] sm:%s71]
    %s130 = scalar_lea.vmem [#allocation0], 32
    %131 = vst [vmem:[%s130] sm:%s71] %v129
    %s132 = smul.addr 4, 3
    %s133 = scalar_lea.vmem [#allocation1], %s132
    %v134 = vld [vmem:[%s133] sm:%s71]
    %s135 = scalar_lea.vmem [#allocation0], 24
    %136 = vst [vmem:[%s135] sm:%s71] %v134
    %s137 = smul.addr 4, 2
    %s138 = scalar_lea.vmem [#allocation1], %s137
    %v139 = vld [vmem:[%s138] sm:%s71]
    %s140 = scalar_lea.vmem [#allocation0], 16
    %141 = vst [vmem:[%s140] sm:%s71] %v139
    %s142 = scalar_lea.vmem [#allocation1], 4
    %v143 = vld [vmem:[%s142] sm:%s71]
    %s144 = scalar_lea.vmem [#allocation0], 8
    %145 = vst [vmem:[%s144] sm:%s71] %v143
    %v146 = vld [vmem:[#allocation1] sm:%s71]
    %147 = vst [vmem:[#allocation0] sm:%s71] %v146
    %s148 = scalar_lea.vmem [#allocation0], 7
    %v149 = vld [vmem:[%s148] ss:$-1 sm:$0xff]
    %v150 = vrot.slane %v149, 5
    %151 = vst [vmem:[#allocation2] sm:$0xff] %v150
    %s152 = scalar_lea.vmem [#allocation0], 8
    %s153 = scalar_lea.vmem %s152, 7 [#allocation0]
    %v154 = vld [vmem:[%s153] ss:$-1 sm:$0xff]
    %v155 = vrot.slane %v154, 5
    %v156 = vlaneseq
    %v157 = vshrl.u32 %v156, 7
    %vm158 = vcmp.lt.s32.totalorder %v157, 3
    %159 = vst.msk [vmem:[#allocation2] sm:$0xff] %vm158, %v155
    %s160 = scalar_lea.vmem [#allocation2], 8
    %s161 = scalar_lea.vmem [#allocation0], 16
    %s162 = scalar_lea.vmem %s161, 7 [#allocation0]
    %v163 = vld [vmem:[%s162] ss:$-1 sm:$0xff]
    %v164 = vrot.slane %v163, 5
    %165 = vst [vmem:[%s160] sm:$0xff] %v164
    %s166 = scalar_lea.vmem %s161, 8 [#allocation0]
    %s167 = scalar_lea.vmem %s166, 7 [#allocation0]
    %v168 = vld [vmem:[%s167] ss:$-1 sm:$0xff]
    %v169 = vrot.slane %v168, 5
    %v170 = vlaneseq
    %v171 = vshrl.u32 %v170, 7
    %vm172 = vcmp.lt.s32.totalorder %v171, 3
    %173 = vst.msk [vmem:[%s160] sm:$0xff] %vm172, %v169
    %s174 = scalar_lea.vmem [#allocation2], 16
    %s175 = scalar_lea.vmem [#allocation0], 32
    %s176 = scalar_lea.vmem %s175, 7 [#allocation0]
    %v177 = vld [vmem:[%s176] ss:$-1 sm:$0xff]
    %v178 = vrot.slane %v177, 5
    %179 = vst [vmem:[%s174] sm:$0xff] %v178
    %s180 = scalar_lea.vmem %s175, 8 [#allocation0]
    %s181 = scalar_lea.vmem %s180, 7 [#allocation0]
    %v182 = vld [vmem:[%s181] ss:$-1 sm:$0xff]
    %v183 = vrot.slane %v182, 5
    %v184 = vlaneseq
    %v185 = vshrl.u32 %v184, 7
    %vm186 = vcmp.lt.s32.totalorder %v185, 3
    %187 = vst.msk [vmem:[%s174] sm:$0xff] %vm186, %v183
    %s188 = scalar_lea.vmem [#allocation2], 24
    %s189 = scalar_lea.vmem [#allocation0], 48
    %s190 = scalar_lea.vmem %s189, 7 [#allocation0]
    %v191 = vld [vmem:[%s190] ss:$-1 sm:$0xff]
    %v192 = vrot.slane %v191, 5
    %193 = vst [vmem:[%s188] sm:$0xff] %v192
    %s194 = scalar_lea.vmem %s189, 8 [#allocation0]
    %s195 = scalar_lea.vmem %s194, 7 [#allocation0]
    %v196 = vld [vmem:[%s195] ss:$-1 sm:$0xff]
    %v197 = vrot.slane %v196, 5
    %v198 = vlaneseq
    %v199 = vshrl.u32 %v198, 7
    %vm200 = vcmp.lt.s32.totalorder %v199, 3
    %201 = vst.msk [vmem:[%s188] sm:$0xff] %vm200, %v197
    %s202 = scalar_lea.vmem [#allocation2], 32
    %s203 = scalar_lea.vmem [#allocation0], 64
    %s204 = scalar_lea.vmem %s203, 7 [#allocation0]
    %v205 = vld [vmem:[%s204] ss:$-1 sm:$0xff]
    %v206 = vrot.slane %v205, 5
    %207 = vst [vmem:[%s202] sm:$0xff] %v206
    %s208 = scalar_lea.vmem %s203, 8 [#allocation0]
    %s209 = scalar_lea.vmem %s208, 7 [#allocation0]
    %v210 = vld [vmem:[%s209] ss:$-1 sm:$0xff]
    %v211 = vrot.slane %v210, 5
    %v212 = vlaneseq
    %v213 = vshrl.u32 %v212, 7
    %vm214 = vcmp.lt.s32.totalorder %v213, 3
    %215 = vst.msk [vmem:[%s202] sm:$0xff] %vm214, %v211
    %s216 = scalar_lea.vmem [#allocation2], 40
    %s217 = scalar_lea.vmem [#allocation0], 80
    %s218 = scalar_lea.vmem %s217, 7 [#allocation0]
    %v219 = vld [vmem:[%s218] ss:$-1 sm:$0xff]
    %v220 = vrot.slane %v219, 5
    %221 = vst [vmem:[%s216] sm:$0xff] %v220
    %s222 = scalar_lea.vmem %s217, 8 [#allocation0]
    %s223 = scalar_lea.vmem %s222, 7 [#allocation0]
    %v224 = vld [vmem:[%s223] ss:$-1 sm:$0xff]
    %v225 = vrot.slane %v224, 5
    %v226 = vlaneseq
    %v227 = vshrl.u32 %v226, 7
    %vm228 = vcmp.lt.s32.totalorder %v227, 3
    %229 = vst.msk [vmem:[%s216] sm:$0xff] %vm228, %v225
    %s230 = scalar_lea.vmem [#allocation2], 48
    %s231 = scalar_lea.vmem [#allocation0], 96
    %s232 = scalar_lea.vmem %s231, 7 [#allocation0]
    %v233 = vld [vmem:[%s232] ss:$-1 sm:$0xff]
    %v234 = vrot.slane %v233, 5
    %235 = vst [vmem:[%s230] sm:$0xff] %v234
    %s236 = scalar_lea.vmem %s231, 8 [#allocation0]
    %s237 = scalar_lea.vmem %s236, 7 [#allocation0]
    %v238 = vld [vmem:[%s237] ss:$-1 sm:$0xff]
    %v239 = vrot.slane %v238, 5
    %v240 = vlaneseq
    %v241 = vshrl.u32 %v240, 7
    %vm242 = vcmp.lt.s32.totalorder %v241, 3
    %243 = vst.msk [vmem:[%s230] sm:$0xff] %vm242, %v239
    %s244 = scalar_lea.vmem [#allocation2], 56
    %s245 = scalar_lea.vmem [#allocation0], 112
    %s246 = scalar_lea.vmem %s245, 7 [#allocation0]
    %v247 = vld [vmem:[%s246] ss:$-1 sm:$0xff]
    %v248 = vrot.slane %v247, 5
    %249 = vst [vmem:[%s244] sm:$0xff] %v248
    %s250 = scalar_lea.vmem %s245, 8 [#allocation0]
    %s251 = scalar_lea.vmem %s250, 7 [#allocation0]
    %v252 = vld [vmem:[%s251] ss:$-1 sm:$0xff]
    %v253 = vrot.slane %v252, 5
    %v254 = vlaneseq
    %v255 = vshrl.u32 %v254, 7
    %vm256 = vcmp.lt.s32.totalorder %v255, 3
    %257 = vst.msk [vmem:[%s244] sm:$0xff] %vm256, %v253
    %s259 = sshllo.u32 0, 4
    %v261 = vld [vmem:[#allocation2] sm:%s259]
    %s262 = sshllo.u32 0, 4
    %263 = vst [vmem:[#allocation3] sm:%s262] %v261
    %s264 = scalar_lea.vmem [#allocation2], 8
    %v265 = vld [vmem:[%s264] sm:%s259]
    %s266 = sshllo.u32 0, 4
    %s267 = scalar_lea.vmem [#allocation3], 4
    %268 = vst [vmem:[%s267] sm:%s266] %v265
    %s269 = scalar_lea.vmem [#allocation2], 16
    %v270 = vld [vmem:[%s269] sm:%s259]
    %s271 = sshllo.u32 0, 4
    %s272 = smul.addr 4, 2
    %s273 = scalar_lea.vmem [#allocation3], %s272
    %274 = vst [vmem:[%s273] sm:%s271] %v270
    %s275 = scalar_lea.vmem [#allocation2], 24
    %v276 = vld [vmem:[%s275] sm:%s259]
    %s277 = sshllo.u32 0, 4
    %s278 = smul.addr 4, 3
    %s279 = scalar_lea.vmem [#allocation3], %s278
    %280 = vst [vmem:[%s279] sm:%s277] %v276
    %s281 = scalar_lea.vmem [#allocation2], 32
    %v282 = vld [vmem:[%s281] sm:%s259]
    %s283 = sshllo.u32 0, 4
    %s284 = smul.addr 4, 4
    %s285 = scalar_lea.vmem [#allocation3], %s284
    %286 = vst [vmem:[%s285] sm:%s283] %v282
    %s287 = scalar_lea.vmem [#allocation2], 40
    %v288 = vld [vmem:[%s287] sm:%s259]
    %s289 = sshllo.u32 0, 4
    %s290 = smul.addr 4, 5
    %s291 = scalar_lea.vmem [#allocation3], %s290
    %292 = vst [vmem:[%s291] sm:%s289] %v288
    %s293 = scalar_lea.vmem [#allocation2], 48
    %v294 = vld [vmem:[%s293] sm:%s259]
    %s295 = sshllo.u32 0, 4
    %s296 = smul.addr 4, 6
    %s297 = scalar_lea.vmem [#allocation3], %s296
    %298 = vst [vmem:[%s297] sm:%s295] %v294
    %s299 = scalar_lea.vmem [#allocation2], 56
    %v300 = vld [vmem:[%s299] sm:%s259]
    %s301 = sshllo.u32 0, 4
    %s302 = smul.addr 4, 7
    %s303 = scalar_lea.vmem [#allocation3], %s302
    %304 = vst [vmem:[%s303] sm:%s301] %v300
    // Predicated region
    $region39: #{reverse.11} parent=1 // pred_check
      _
    $region40: #{reverse.11} parent=1 // pred_check_branch
      %306 = sbr.rel (0) target = $region42
    $region41: #{reverse.11} parent=1 // pred_region
      // Predicated region
      $region43: #{reverse.11} parent=41 // pred_check
        _
      $region44: #{reverse.11} parent=41 // pred_check_branch
        %308 = sbr.rel target = $region46
      $region45: #{reverse.11} parent=41 // pred_region
        // Predicated region
        $region58: #{reverse.11} parent=45 // pred_check
          _
        $region59: #{reverse.11} parent=45 // pred_check_branch
          %337 = sbr.rel (0) target = $region61
        $region60: #{reverse.11} parent=45 // pred_region
          loop: start=0, step=1, limit=1
          $region62: #{reverse.11} parent=60 // loop_pre_header
            _
          $region63: #{reverse.11} parent=60 // loop_header
            %s339 = sphi 0, %s343
            %p340 = scmp.ge.s32.totalorder %s339, 1
            %s344 = sphi [#allocation3], [#allocation3]
            %s345 = sphi %s1, %s1
          $region64: #{reverse.11} parent=60 // loop_header_branch
            %342 = sbr.rel (%p340) target = $region68
          $region65: #{reverse.11} parent=60 // loop_body
            _
          $region66: #{reverse.11} parent=60 // loop_footer
            %s343 = sadd.s32 1, %s339
          $region67: #{reverse.11} parent=60 // loop_footer_branch
            %338 = sbr.rel target = $region63
          $region68: #{reverse.11} parent=60 // loop_exit
            _
          loop: start=0, step=1, limit=1
          $region69: #{reverse.11} parent=60 // loop_pre_header
            _
          $region70: #{reverse.11} parent=60 // loop_header
            %s348 = sphi 0, %s352
            %p349 = scmp.ge.s32.totalorder %s348, 1
            %s353 = sphi [#allocation3], [#allocation3]
            %s354 = sphi %s1, %s1
          $region71: #{reverse.11} parent=60 // loop_header_branch
            %351 = sbr.rel (%p349) target = $region75
          $region72: #{reverse.11} parent=60 // loop_body
            %v355 = vld [vmem:[%s353] sm:$0xf]
            %356 = vst [vmem:[%s354] sm:$0xf] %v355
            %v357 = vld [vmem:[%s353 + $0x4] sm:$0xf]
            %358 = vst [vmem:[%s354 + $0x4] sm:$0xf] %v357
            %v359 = vld [vmem:[%s353 + $0x8] sm:$0xf]
            %360 = vst [vmem:[%s354 + $0x8] sm:$0xf] %v359
            %v361 = vld [vmem:[%s353 + $0xc] sm:$0xf]
            %362 = vst [vmem:[%s354 + $0xc] sm:$0xf] %v361
            %v363 = vld [vmem:[%s353 + $0x10] sm:$0xf]
            %364 = vst [vmem:[%s354 + $0x10] sm:$0xf] %v363
            %v365 = vld [vmem:[%s353 + $0x14] sm:$0xf]
            %366 = vst [vmem:[%s354 + $0x14] sm:$0xf] %v365
            %v367 = vld [vmem:[%s353 + $0x18] sm:$0xf]
            %368 = vst [vmem:[%s354 + $0x18] sm:$0xf] %v367
            %v369 = vld [vmem:[%s353 + $0x1c] sm:$0xf]
            %370 = vst [vmem:[%s354 + $0x1c] sm:$0xf] %v369
          $region73: #{reverse.11} parent=60 // loop_footer
            %s352 = sadd.s32 1, %s348
          $region74: #{reverse.11} parent=60 // loop_footer_branch
            %347 = sbr.rel target = $region70
          $region75: #{reverse.11} parent=60 // loop_exit
            _
        $region61: #{reverse.11} parent=45 // pred_fallthru
          _
      $region46: #{reverse.11} parent=41 // pred_fallthru
        _
      // Predicated region
      $region47: #{reverse.11} parent=41 // pred_check
        _
      $region48: #{reverse.11} parent=41 // pred_check_branch
        %310 = sbr.rel (0) target = $region50
      $region49: #{reverse.11} parent=41 // pred_region
        loop: start=0, step=1, limit=1
        $region51: #{reverse.11} parent=49 // loop_pre_header
          _
        $region52: #{reverse.11} parent=49 // loop_header
          %s313 = sphi 0, %s317
          %p314 = scmp.ge.s32.totalorder %s313, 1
          %s318 = sphi [#allocation3], [#allocation3]
          %s319 = sphi %s1, %s1
        $region53: #{reverse.11} parent=49 // loop_header_branch
          %316 = sbr.rel (%p314) target = $region57
        $region54: #{reverse.11} parent=49 // loop_body
          %v320 = vld [vmem:[%s318] sm:$0xf]
          %321 = vst [vmem:[%s319] sm:$0xf] %v320
          %v322 = vld [vmem:[%s318 + $0x4] sm:$0xf]
          %323 = vst [vmem:[%s319 + $0x4] sm:$0xf] %v322
          %v324 = vld [vmem:[%s318 + $0x8] sm:$0xf]
          %325 = vst [vmem:[%s319 + $0x8] sm:$0xf] %v324
          %v326 = vld [vmem:[%s318 + $0xc] sm:$0xf]
          %327 = vst [vmem:[%s319 + $0xc] sm:$0xf] %v326
          %v328 = vld [vmem:[%s318 + $0x10] sm:$0xf]
          %329 = vst [vmem:[%s319 + $0x10] sm:$0xf] %v328
          %v330 = vld [vmem:[%s318 + $0x14] sm:$0xf]
          %331 = vst [vmem:[%s319 + $0x14] sm:$0xf] %v330
          %v332 = vld [vmem:[%s318 + $0x18] sm:$0xf]
          %333 = vst [vmem:[%s319 + $0x18] sm:$0xf] %v332
          %v334 = vld [vmem:[%s318 + $0x1c] sm:$0xf]
          %335 = vst [vmem:[%s319 + $0x1c] sm:$0xf] %v334
        $region55: #{reverse.11} parent=49 // loop_footer
          %s317 = sadd.s32 1, %s313
        $region56: #{reverse.11} parent=49 // loop_footer_branch
          %312 = sbr.rel target = $region52
        $region57: #{reverse.11} parent=49 // loop_exit
          _
      $region50: #{reverse.11} parent=41 // pred_fallthru
        _
    $region42: #{reverse.11} parent=1 // pred_fallthru
      _
    %371 = vnop

// kernel: ffc_resnet_block.12
$region0: #{ffc_resnet_block.12}
  #allocation0 [shape = 'u32[]', space=smem, size = 0x4, offset = 0x4, fixed_abs, tag = 'smem constant byte address 0x4 - core index']
  #allocation1 [shape = 'u32[144,128]{1,0:T(1,128)}', space=vmem, size = 0x12000, scoped, tag = 'internal scratch']
  %s0 = inlined_call_operand.vmem [shape: bf16[8,8], index: 0, kind: input, shape index: {}]
  %s1 = inlined_call_operand.vmem [shape: bf16[8,288], index: 1, kind: input, shape index: {}]
  %s2 = inlined_call_operand.vmem [shape: f32[8,1], index: 2, kind: input, shape index: {}]
  %s3 = inlined_call_operand.vmem [shape: f32[8,1], index: 3, kind: input, shape index: {}]
  %s4 = inlined_call_operand.vmem [shape: f32[8,288], index: 4, kind: output, shape index: {}]
  %s5 = sld [smem:[#allocation0]]
  $region26: #{ffc_resnet_block.12} parent=0
    _
  %s7 = ssub.s32 1, %s5
  %s8 = scalar_select 0, %s7, %s5
  // Predicated region
  $region2: #{ffc_resnet_block.12} parent=0 // pred_check
    _
  $region3: #{ffc_resnet_block.12} parent=0 // pred_check_branch
    %10 = sbr.rel (0) target = $region5
  $region4: #{ffc_resnet_block.12} parent=0 // pred_region
    _
  $region5: #{ffc_resnet_block.12} parent=0 // pred_fallthru
    _
  // Predicated region
  $region6: #{ffc_resnet_block.12} parent=0 // pred_check
    _
  $region7: #{ffc_resnet_block.12} parent=0 // pred_check_branch
    %12 = sbr.rel (0) target = $region9
  $region8: #{ffc_resnet_block.12} parent=0 // pred_region
    _
  $region9: #{ffc_resnet_block.12} parent=0 // pred_fallthru
    _
  // Predicated region
  $region10: #{ffc_resnet_block.12} parent=0 // pred_check
    _
  $region11: #{ffc_resnet_block.12} parent=0 // pred_check_branch
    %14 = sbr.rel (0) target = $region13
  $region12: #{ffc_resnet_block.12} parent=0 // pred_region
    _
  $region13: #{ffc_resnet_block.12} parent=0 // pred_fallthru
    _
  // Predicated region
  $region14: #{ffc_resnet_block.12} parent=0 // pred_check
    _
  $region15: #{ffc_resnet_block.12} parent=0 // pred_check_branch
    %16 = sbr.rel (0) target = $region17
  $region16: #{ffc_resnet_block.12} parent=0 // pred_region
    _
  $region17: #{ffc_resnet_block.12} parent=0 // pred_fallthru
    _
  %v18 = vld [vmem:[%s1] sm:$0xff]
  %v19 = vld [vmem:[%s1 + $0x8] sm:$0xf]
  %v20 = vld [vmem:[%s0] sm:$0xf]
  %v21 = vld [vmem:[%s2] sm:$0xff]
  %23 = vset.pattern.permute.xlu0 0
  %24 = vperm.xlu0 %23, %v21
  %v25 = vpop.permute.xlu0 %24
  %v29 = vunpack.c.l.b16 %v18
  %v30 = vunpack.c.h.b16 %v18
  %v31 = vunpack.c.l.b16 %v19
  %v32 = vpack.c.b16 %v29, %v29
  %v33 = vpack.c.b16 %v30, %v30
  %v34 = vpack.c.b16 %v31, %v31
  %vm35 = vcmask 64512
  %v37 = vsel %vm35, %v20, 0
  %vm39 = vcmask 1043456
  %v41 = vsel %vm39, %v32, 0
  %v44 = vsel %vm39, %v33, 0
  %v47 = vsel %vm39, %v34, 0
  %49 = vmatprep.subr.bf16.mxu0 %v44
  %50 = vmatpush1.bf16.msra.mxu0 %v41
  %51 = vmatprep.subr.bf16.mxu0 0
  %52 = vmatpush1.bf16.msra.mxu0 0
  %53 = vmatprep.subr.bf16.mxu0 0
  %54 = vmatpush1.bf16.msra.mxu0 0
  %55 = vmatprep.subr.bf16.mxu0 0
  %56 = vmatpush1.bf16.msra.mxu0 0
  %57 = vmatprep.subr.bf16.mxu0 0
  %58 = vmatpush1.bf16.msra.mxu0 0
  %59 = vmatprep.subr.bf16.mxu0 0
  %60 = vmatpush1.bf16.msra.mxu0 0
  %61 = vmatprep.subr.bf16.mxu0 0
  %62 = vmatpush1.bf16.msra.mxu0 0
  %63 = vmatprep.subr.bf16.mxu0 0
  %64 = vmatpush1.bf16.msra.mxu0 0
  %65 = vmatprep.subr.bf16.mxu0 0
  %66 = vmatpush1.bf16.msra.mxu0 0
  %67 = vmatprep.subr.bf16.mxu0 0
  %68 = vmatpush1.bf16.msra.mxu0 0
  %69 = vmatprep.subr.bf16.mxu0 0
  %70 = vmatpush1.bf16.msra.mxu0 0
  %71 = vmatprep.subr.bf16.mxu0 0
  %72 = vmatpush1.bf16.msra.mxu0 0
  %73 = vmatprep.subr.bf16.mxu0 0
  %74 = vmatpush1.bf16.msra.mxu0 0
  %75 = vmatprep.subr.bf16.mxu0 0
  %76 = vmatpush1.bf16.msra.mxu0 0
  %77 = vmatprep.subr.bf16.mxu0 0
  %78 = vmatpush1.bf16.msra.mxu0 0
  %79 = vmatprep.subr.bf16.mxu0 0
  %80 = vmatpush1.bf16.msra.mxu0 0
  %81 = vmatprep.mubr.bf16.mxu0 0
  %82 = vmatmul.mubr.bf16.gmra.mrb[0].mxu0 %v37
  %v83 = vpop.f32.mrb[0].mxu0
  %v84 = vadd.f32 %v25, %v83
  %v85 = vpop.f32.mrb[0].mxu0
  %v86 = vadd.f32 %v25, %v85
  %v87 = vpop.f32.mrb[0].mxu0
  %v88 = vpop.f32.mrb[0].mxu0
  %89 = vdwg.mxu0
  %90 = vmatprep.subr.bf16.mxu0 0
  %91 = vmatpush1.bf16.msra.mxu0 %v47
  %92 = vmatprep.subr.bf16.mxu0 0
  %93 = vmatpush1.bf16.msra.mxu0 0
  %94 = vmatprep.subr.bf16.mxu0 0
  %95 = vmatpush1.bf16.msra.mxu0 0
  %96 = vmatprep.subr.bf16.mxu0 0
  %97 = vmatpush1.bf16.msra.mxu0 0
  %98 = vmatprep.subr.bf16.mxu0 0
  %99 = vmatpush1.bf16.msra.mxu0 0
  %100 = vmatprep.subr.bf16.mxu0 0
  %101 = vmatpush1.bf16.msra.mxu0 0
  %102 = vmatprep.subr.bf16.mxu0 0
  %103 = vmatpush1.bf16.msra.mxu0 0
  %104 = vmatprep.subr.bf16.mxu0 0
  %105 = vmatpush1.bf16.msra.mxu0 0
  %106 = vmatprep.subr.bf16.mxu0 0
  %107 = vmatpush1.bf16.msra.mxu0 0
  %108 = vmatprep.subr.bf16.mxu0 0
  %109 = vmatpush1.bf16.msra.mxu0 0
  %110 = vmatprep.subr.bf16.mxu0 0
  %111 = vmatpush1.bf16.msra.mxu0 0
  %112 = vmatprep.subr.bf16.mxu0 0
  %113 = vmatpush1.bf16.msra.mxu0 0
  %114 = vmatprep.subr.bf16.mxu0 0
  %115 = vmatpush1.bf16.msra.mxu0 0
  %116 = vmatprep.subr.bf16.mxu0 0
  %117 = vmatpush1.bf16.msra.mxu0 0
  %118 = vmatprep.subr.bf16.mxu0 0
  %119 = vmatpush1.bf16.msra.mxu0 0
  %120 = vmatprep.subr.bf16.mxu0 0
  %121 = vmatpush1.bf16.msra.mxu0 0
  %122 = vmatprep.mubr.bf16.mxu0 0
  %123 = vmatmul.mubr.bf16.gmra.mrb[0].mxu0 %v37
  %v124 = vpop.f32.mrb[0].mxu0
  %v125 = vadd.f32 %v25, %v124
  %v126 = vpop.f32.mrb[0].mxu0
  %v127 = vpop.f32.mrb[0].mxu0
  %v128 = vpop.f32.mrb[0].mxu0
  %129 = vdwg.mxu0
  %v130 = vld [vmem:[%s3] sm:$0xff]
  %132 = vset.pattern.permute.xlu0 0
  %133 = vperm.xlu0 %132, %v130
  %v134 = vpop.permute.xlu0 %133
  %v136 = vmax.f32 %v84, %v134
  %v137 = vmax.f32 %v86, %v134
  %v138 = vmax.f32 %v125, %v134
  %139 = vst [vmem:[%s4] sm:$0xff] %v136
  %140 = vst [vmem:[%s4 + $0x8] sm:$0xff] %v137
  %vm141 = vcmask 261120
  %142 = vst.msk [vmem:[%s4 + $0x10] sm:$0xff] %vm141, %v138
  // Predicated region
  $region18: #{ffc_resnet_block.12} parent=0 // pred_check
    _
  $region19: #{ffc_resnet_block.12} parent=0 // pred_check_branch
    %144 = sbr.rel (0) target = $region21
  $region20: #{ffc_resnet_block.12} parent=0 // pred_region
    _
  $region21: #{ffc_resnet_block.12} parent=0 // pred_fallthru
    _
  // Predicated region
  $region22: #{ffc_resnet_block.12} parent=0 // pred_check
    _
  $region23: #{ffc_resnet_block.12} parent=0 // pred_check_branch
    %146 = sbr.rel (0) target = $region25
  $region24: #{ffc_resnet_block.12} parent=0 // pred_region
    _
  $region25: #{ffc_resnet_block.12} parent=0 // pred_fallthru
    _

// kernel: reverse.9
$region0: #{reverse.9}
  %s0 = inlined_call_operand.vmem [shape: f32[4,2,16,7], index: 0, kind: input, shape index: {}]
  %s1 = inlined_call_operand.vmem [shape: f32[4,2,16,7], index: 1, kind: output, shape index: {}]
  $region1: #{reverse.9} parent=0
    #allocation0 [shape = 'u8[65536]{0}', space=vmem, size = 0x10000, scoped, tag = 'operand span for operand 0']
    #allocation1 [shape = 'u8[32768]{0}', space=vmem, size = 0x8000, scoped, tag = 'operand span for operand 1']
    %s2 = scalar_lea.vmem [#allocation0], 8
    // Predicated region
    $region2: #{reverse.9} parent=1 // pred_check
      _
    $region3: #{reverse.9} parent=1 // pred_check_branch
      %4 = sbr.rel (0) target = $region5
    $region4: #{reverse.9} parent=1 // pred_region
      // Predicated region
      $region6: #{reverse.9} parent=4 // pred_check
        _
      $region7: #{reverse.9} parent=4 // pred_check_branch
        %6 = sbr.rel (0) target = $region9
      $region8: #{reverse.9} parent=4 // pred_region
        // Predicated region
        $region21: #{reverse.9} parent=8 // pred_check
          _
        $region22: #{reverse.9} parent=8 // pred_check_branch
          %35 = sbr.rel (0) target = $region24
        $region23: #{reverse.9} parent=8 // pred_region
          loop: start=0, step=1, limit=1
          $region25: #{reverse.9} parent=23 // loop_pre_header
            _
          $region26: #{reverse.9} parent=23 // loop_header
            %s37 = sphi 0, %s41
            %p38 = scmp.ge.s32.totalorder %s37, 1
            %s42 = sphi %s0, %s0
            %s43 = sphi %s2, %s2
          $region27: #{reverse.9} parent=23 // loop_header_branch
            %40 = sbr.rel (%p38) target = $region31
          $region28: #{reverse.9} parent=23 // loop_body
            %v44 = vld [vmem:[%s42] sm:$0xff]
            %45 = vst [vmem:[%s43] sm:$0xff] %v44
            %v46 = vld [vmem:[%s42 + $0x8] sm:$0xff]
            %47 = vst [vmem:[%s43 + $0x10] sm:$0xff] %v46
            %v48 = vld [vmem:[%s42 + $0x10] sm:$0xff]
            %49 = vst [vmem:[%s43 + $0x20] sm:$0xff] %v48
            %v50 = vld [vmem:[%s42 + $0x18] sm:$0xff]
            %51 = vst [vmem:[%s43 + $0x30] sm:$0xff] %v50
            %v52 = vld [vmem:[%s42 + $0x20] sm:$0xff]
            %53 = vst [vmem:[%s43 + $0x40] sm:$0xff] %v52
            %v54 = vld [vmem:[%s42 + $0x28] sm:$0xff]
            %55 = vst [vmem:[%s43 + $0x50] sm:$0xff] %v54
            %v56 = vld [vmem:[%s42 + $0x30] sm:$0xff]
            %57 = vst [vmem:[%s43 + $0x60] sm:$0xff] %v56
            %v58 = vld [vmem:[%s42 + $0x38] sm:$0xff]
            %59 = vst [vmem:[%s43 + $0x70] sm:$0xff] %v58
          $region29: #{reverse.9} parent=23 // loop_footer
            %s41 = sadd.s32 1, %s37
          $region30: #{reverse.9} parent=23 // loop_footer_branch
            %36 = sbr.rel target = $region26
          $region31: #{reverse.9} parent=23 // loop_exit
            _
        $region24: #{reverse.9} parent=8 // pred_fallthru
          _
        // Predicated region
        $region32: #{reverse.9} parent=8 // pred_check
          _
        $region33: #{reverse.9} parent=8 // pred_check_branch
          %61 = sbr.rel target = $region35
        $region34: #{reverse.9} parent=8 // pred_region
          _
        $region35: #{reverse.9} parent=8 // pred_fallthru
          _
      $region9: #{reverse.9} parent=4 // pred_fallthru
        _
      // Predicated region
      $region10: #{reverse.9} parent=4 // pred_check
        _
      $region11: #{reverse.9} parent=4 // pred_check_branch
        %8 = sbr.rel target = $region13
      $region12: #{reverse.9} parent=4 // pred_region
        loop: start=0, step=1, limit=1
        $region14: #{reverse.9} parent=12 // loop_pre_header
          _
        $region15: #{reverse.9} parent=12 // loop_header
          %s11 = sphi 0, %s15
          %p12 = scmp.ge.s32.totalorder %s11, 1
          %s16 = sphi %s0, %s0
          %s17 = sphi %s2, %s2
        $region16: #{reverse.9} parent=12 // loop_header_branch
          %14 = sbr.rel (%p12) target = $region20
        $region17: #{reverse.9} parent=12 // loop_body
          %v18 = vld [vmem:[%s16] sm:$0xff]
          %19 = vst [vmem:[%s17] sm:$0xff] %v18
          %v20 = vld [vmem:[%s16 + $0x8] sm:$0xff]
          %21 = vst [vmem:[%s17 + $0x10] sm:$0xff] %v20
          %v22 = vld [vmem:[%s16 + $0x10] sm:$0xff]
          %23 = vst [vmem:[%s17 + $0x20] sm:$0xff] %v22
          %v24 = vld [vmem:[%s16 + $0x18] sm:$0xff]
          %25 = vst [vmem:[%s17 + $0x30] sm:$0xff] %v24
          %v26 = vld [vmem:[%s16 + $0x20] sm:$0xff]
          %27 = vst [vmem:[%s17 + $0x40] sm:$0xff] %v26
          %v28 = vld [vmem:[%s16 + $0x28] sm:$0xff]
          %29 = vst [vmem:[%s17 + $0x50] sm:$0xff] %v28
          %v30 = vld [vmem:[%s16 + $0x30] sm:$0xff]
          %31 = vst [vmem:[%s17 + $0x60] sm:$0xff] %v30
          %v32 = vld [vmem:[%s16 + $0x38] sm:$0xff]
          %33 = vst [vmem:[%s17 + $0x70] sm:$0xff] %v32
        $region18: #{reverse.9} parent=12 // loop_footer
          %s15 = sadd.s32 1, %s11
        $region19: #{reverse.9} parent=12 // loop_footer_branch
          %10 = sbr.rel target = $region15
        $region20: #{reverse.9} parent=12 // loop_exit
          _
      $region13: #{reverse.9} parent=4 // pred_fallthru
        _
    $region5: #{reverse.9} parent=1 // pred_fallthru
      _
    %62 = vnop
    %s63 = scalar_lea.vmem [#allocation0], 7
    %v64 = vld [vmem:[%s63] ss:$-1 sm:$0xff]
    %v65 = vrot.slane %v64, 1
    %66 = vst [vmem:[#allocation1] sm:$0xff] %v65
    %s67 = scalar_lea.vmem [#allocation0], 8
    %s68 = scalar_lea.vmem %s67, 7 [#allocation0]
    %v69 = vld [vmem:[%s68] ss:$-1 sm:$0xff]
    %v70 = vrot.slane %v69, 1
    %v71 = vlaneseq
    %v72 = vshrl.u32 %v71, 7
    %vm73 = vcmp.lt.s32.totalorder %v72, 7
    %74 = vst.msk [vmem:[#allocation1] sm:$0xff] %vm73, %v70
    %s75 = scalar_lea.vmem [#allocation1], 8
    %s76 = scalar_lea.vmem [#allocation0], 16
    %s77 = scalar_lea.vmem %s76, 7 [#allocation0]
    %v78 = vld [vmem:[%s77] ss:$-1 sm:$0xff]
    %v79 = vrot.slane %v78, 1
    %80 = vst [vmem:[%s75] sm:$0xff] %v79
    %s81 = scalar_lea.vmem %s76, 8 [#allocation0]
    %s82 = scalar_lea.vmem %s81, 7 [#allocation0]
    %v83 = vld [vmem:[%s82] ss:$-1 sm:$0xff]
    %v84 = vrot.slane %v83, 1
    %v85 = vlaneseq
    %v86 = vshrl.u32 %v85, 7
    %vm87 = vcmp.lt.s32.totalorder %v86, 7
    %88 = vst.msk [vmem:[%s75] sm:$0xff] %vm87, %v84
    %s89 = scalar_lea.vmem [#allocation1], 16
    %s90 = scalar_lea.vmem [#allocation0], 32
    %s91 = scalar_lea.vmem %s90, 7 [#allocation0]
    %v92 = vld [vmem:[%s91] ss:$-1 sm:$0xff]
    %v93 = vrot.slane %v92, 1
    %94 = vst [vmem:[%s89] sm:$0xff] %v93
    %s95 = scalar_lea.vmem %s90, 8 [#allocation0]
    %s96 = scalar_lea.vmem %s95, 7 [#allocation0]
    %v97 = vld [vmem:[%s96] ss:$-1 sm:$0xff]
    %v98 = vrot.slane %v97, 1
    %v99 = vlaneseq
    %v100 = vshrl.u32 %v99, 7
    %vm101 = vcmp.lt.s32.totalorder %v100, 7
    %102 = vst.msk [vmem:[%s89] sm:$0xff] %vm101, %v98
    %s103 = scalar_lea.vmem [#allocation1], 24
    %s104 = scalar_lea.vmem [#allocation0], 48
    %s105 = scalar_lea.vmem %s104, 7 [#allocation0]
    %v106 = vld [vmem:[%s105] ss:$-1 sm:$0xff]
    %v107 = vrot.slane %v106, 1
    %108 = vst [vmem:[%s103] sm:$0xff] %v107
    %s109 = scalar_lea.vmem %s104, 8 [#allocation0]
    %s110 = scalar_lea.vmem %s109, 7 [#allocation0]
    %v111 = vld [vmem:[%s110] ss:$-1 sm:$0xff]
    %v112 = vrot.slane %v111, 1
    %v113 = vlaneseq
    %v114 = vshrl.u32 %v113, 7
    %vm115 = vcmp.lt.s32.totalorder %v114, 7
    %116 = vst.msk [vmem:[%s103] sm:$0xff] %vm115, %v112
    %s117 = scalar_lea.vmem [#allocation1], 32
    %s118 = scalar_lea.vmem [#allocation0], 64
    %s119 = scalar_lea.vmem %s118, 7 [#allocation0]
    %v120 = vld [vmem:[%s119] ss:$-1 sm:$0xff]
    %v121 = vrot.slane %v120, 1
    %122 = vst [vmem:[%s117] sm:$0xff] %v121
    %s123 = scalar_lea.vmem %s118, 8 [#allocation0]
    %s124 = scalar_lea.vmem %s123, 7 [#allocation0]
    %v125 = vld [vmem:[%s124] ss:$-1 sm:$0xff]
    %v126 = vrot.slane %v125, 1
    %v127 = vlaneseq
    %v128 = vshrl.u32 %v127, 7
    %vm129 = vcmp.lt.s32.totalorder %v128, 7
    %130 = vst.msk [vmem:[%s117] sm:$0xff] %vm129, %v126
    %s131 = scalar_lea.vmem [#allocation1], 40
    %s132 = scalar_lea.vmem [#allocation0], 80
    %s133 = scalar_lea.vmem %s132, 7 [#allocation0]
    %v134 = vld [vmem:[%s133] ss:$-1 sm:$0xff]
    %v135 = vrot.slane %v134, 1
    %136 = vst [vmem:[%s131] sm:$0xff] %v135
    %s137 = scalar_lea.vmem %s132, 8 [#allocation0]
    %s138 = scalar_lea.vmem %s137, 7 [#allocation0]
    %v139 = vld [vmem:[%s138] ss:$-1 sm:$0xff]
    %v140 = vrot.slane %v139, 1
    %v141 = vlaneseq
    %v142 = vshrl.u32 %v141, 7
    %vm143 = vcmp.lt.s32.totalorder %v142, 7
    %144 = vst.msk [vmem:[%s131] sm:$0xff] %vm143, %v140
    %s145 = scalar_lea.vmem [#allocation1], 48
    %s146 = scalar_lea.vmem [#allocation0], 96
    %s147 = scalar_lea.vmem %s146, 7 [#allocation0]
    %v148 = vld [vmem:[%s147] ss:$-1 sm:$0xff]
    %v149 = vrot.slane %v148, 1
    %150 = vst [vmem:[%s145] sm:$0xff] %v149
    %s151 = scalar_lea.vmem %s146, 8 [#allocation0]
    %s152 = scalar_lea.vmem %s151, 7 [#allocation0]
    %v153 = vld [vmem:[%s152] ss:$-1 sm:$0xff]
    %v154 = vrot.slane %v153, 1
    %v155 = vlaneseq
    %v156 = vshrl.u32 %v155, 7
    %vm157 = vcmp.lt.s32.totalorder %v156, 7
    %158 = vst.msk [vmem:[%s145] sm:$0xff] %vm157, %v154
    %s159 = scalar_lea.vmem [#allocation1], 56
    %s160 = scalar_lea.vmem [#allocation0], 112
    %s161 = scalar_lea.vmem %s160, 7 [#allocation0]
    %v162 = vld [vmem:[%s161] ss:$-1 sm:$0xff]
    %v163 = vrot.slane %v162, 1
    %164 = vst [vmem:[%s159] sm:$0xff] %v163
    %s165 = scalar_lea.vmem %s160, 8 [#allocation0]
    %s166 = scalar_lea.vmem %s165, 7 [#allocation0]
    %v167 = vld [vmem:[%s166] ss:$-1 sm:$0xff]
    %v168 = vrot.slane %v167, 1
    %v169 = vlaneseq
    %v170 = vshrl.u32 %v169, 7
    %vm171 = vcmp.lt.s32.totalorder %v170, 7
    %172 = vst.msk [vmem:[%s159] sm:$0xff] %vm171, %v168
    // Predicated region
    $region36: #{reverse.9} parent=1 // pred_check
      _
    $region37: #{reverse.9} parent=1 // pred_check_branch
      %174 = sbr.rel (0) target = $region39
    $region38: #{reverse.9} parent=1 // pred_region
      // Predicated region
      $region40: #{reverse.9} parent=38 // pred_check
        _
      $region41: #{reverse.9} parent=38 // pred_check_branch
        %176 = sbr.rel (0) target = $region43
      $region42: #{reverse.9} parent=38 // pred_region
        // Predicated region
        $region55: #{reverse.9} parent=42 // pred_check
          _
        $region56: #{reverse.9} parent=42 // pred_check_branch
          %205 = sbr.rel (0) target = $region58
        $region57: #{reverse.9} parent=42 // pred_region
          loop: start=0, step=1, limit=1
          $region59: #{reverse.9} parent=57 // loop_pre_header
            _
          $region60: #{reverse.9} parent=57 // loop_header
            %s207 = sphi 0, %s211
            %p208 = scmp.ge.s32.totalorder %s207, 1
            %s212 = sphi [#allocation1], [#allocation1]
            %s213 = sphi %s1, %s1
          $region61: #{reverse.9} parent=57 // loop_header_branch
            %210 = sbr.rel (%p208) target = $region65
          $region62: #{reverse.9} parent=57 // loop_body
            %v214 = vld [vmem:[%s212] sm:$0xff]
            %215 = vst [vmem:[%s213] sm:$0xff] %v214
            %v216 = vld [vmem:[%s212 + $0x8] sm:$0xff]
            %217 = vst [vmem:[%s213 + $0x8] sm:$0xff] %v216
            %v218 = vld [vmem:[%s212 + $0x10] sm:$0xff]
            %219 = vst [vmem:[%s213 + $0x10] sm:$0xff] %v218
            %v220 = vld [vmem:[%s212 + $0x18] sm:$0xff]
            %221 = vst [vmem:[%s213 + $0x18] sm:$0xff] %v220
            %v222 = vld [vmem:[%s212 + $0x20] sm:$0xff]
            %223 = vst [vmem:[%s213 + $0x20] sm:$0xff] %v222
            %v224 = vld [vmem:[%s212 + $0x28] sm:$0xff]
            %225 = vst [vmem:[%s213 + $0x28] sm:$0xff] %v224
            %v226 = vld [vmem:[%s212 + $0x30] sm:$0xff]
            %227 = vst [vmem:[%s213 + $0x30] sm:$0xff] %v226
            %v228 = vld [vmem:[%s212 + $0x38] sm:$0xff]
            %229 = vst [vmem:[%s213 + $0x38] sm:$0xff] %v228
          $region63: #{reverse.9} parent=57 // loop_footer
            %s211 = sadd.s32 1, %s207
          $region64: #{reverse.9} parent=57 // loop_footer_branch
            %206 = sbr.rel target = $region60
          $region65: #{reverse.9} parent=57 // loop_exit
            _
        $region58: #{reverse.9} parent=42 // pred_fallthru
          _
        // Predicated region
        $region66: #{reverse.9} parent=42 // pred_check
          _
        $region67: #{reverse.9} parent=42 // pred_check_branch
          %231 = sbr.rel target = $region69
        $region68: #{reverse.9} parent=42 // pred_region
          _
        $region69: #{reverse.9} parent=42 // pred_fallthru
          _
      $region43: #{reverse.9} parent=38 // pred_fallthru
        _
      // Predicated region
      $region44: #{reverse.9} parent=38 // pred_check
        _
      $region45: #{reverse.9} parent=38 // pred_check_branch
        %178 = sbr.rel target = $region47
      $region46: #{reverse.9} parent=38 // pred_region
        loop: start=0, step=1, limit=1
        $region48: #{reverse.9} parent=46 // loop_pre_header
          _
        $region49: #{reverse.9} parent=46 // loop_header
          %s181 = sphi 0, %s185
          %p182 = scmp.ge.s32.totalorder %s181, 1
          %s186 = sphi [#allocation1], [#allocation1]
          %s187 = sphi %s1, %s1
        $region50: #{reverse.9} parent=46 // loop_header_branch
          %184 = sbr.rel (%p182) target = $region54
        $region51: #{reverse.9} parent=46 // loop_body
          %v188 = vld [vmem:[%s186] sm:$0xff]
          %189 = vst [vmem:[%s187] sm:$0xff] %v188
          %v190 = vld [vmem:[%s186 + $0x8] sm:$0xff]
          %191 = vst [vmem:[%s187 + $0x8] sm:$0xff] %v190
          %v192 = vld [vmem:[%s186 + $0x10] sm:$0xff]
          %193 = vst [vmem:[%s187 + $0x10] sm:$0xff] %v192
          %v194 = vld [vmem:[%s186 + $0x18] sm:$0xff]
          %195 = vst [vmem:[%s187 + $0x18] sm:$0xff] %v194
          %v196 = vld [vmem:[%s186 + $0x20] sm:$0xff]
          %197 = vst [vmem:[%s187 + $0x20] sm:$0xff] %v196
          %v198 = vld [vmem:[%s186 + $0x28] sm:$0xff]
          %199 = vst [vmem:[%s187 + $0x28] sm:$0xff] %v198
          %v200 = vld [vmem:[%s186 + $0x30] sm:$0xff]
          %201 = vst [vmem:[%s187 + $0x30] sm:$0xff] %v200
          %v202 = vld [vmem:[%s186 + $0x38] sm:$0xff]
          %203 = vst [vmem:[%s187 + $0x38] sm:$0xff] %v202
        $region52: #{reverse.9} parent=46 // loop_footer
          %s185 = sadd.s32 1, %s181
        $region53: #{reverse.9} parent=46 // loop_footer_branch
          %180 = sbr.rel target = $region49
        $region54: #{reverse.9} parent=46 // loop_exit
          _
      $region47: #{reverse.9} parent=38 // pred_fallthru
        _
    $region39: #{reverse.9} parent=1 // pred_fallthru
      _
    %232 = vnop

// kernel: ffc_resnet_block.10
$region0: #{ffc_resnet_block.10}
  #allocation0 [shape = 'u32[]', space=smem, size = 0x4, offset = 0x4, fixed_abs, tag = 'smem constant byte address 0x4 - core index']
  #allocation1 [shape = 'u32[144,128]{1,0:T(1,128)}', space=vmem, size = 0x12000, scoped, tag = 'internal scratch']
  %s0 = inlined_call_operand.vmem [shape: bf16[16,144], index: 0, kind: input, shape index: {}]
  %s1 = inlined_call_operand.vmem [shape: bf16[144,512], index: 1, kind: input, shape index: {}]
  %s2 = inlined_call_operand.vmem [shape: f32[16,1], index: 2, kind: input, shape index: {}]
  %s3 = inlined_call_operand.vmem [shape: f32[16,1], index: 3, kind: input, shape index: {}]
  %s4 = inlined_call_operand.vmem [shape: f32[16,512], index: 4, kind: output, shape index: {}]
  %s5 = sld [smem:[#allocation0]]
  $region26: #{ffc_resnet_block.10} parent=0
    _
  %s7 = ssub.s32 1, %s5
  %s8 = scalar_select 0, %s7, %s5
  // Predicated region
  $region2: #{ffc_resnet_block.10} parent=0 // pred_check
    _
  $region3: #{ffc_resnet_block.10} parent=0 // pred_check_branch
    %10 = sbr.rel (0) target = $region5
  $region4: #{ffc_resnet_block.10} parent=0 // pred_region
    _
  $region5: #{ffc_resnet_block.10} parent=0 // pred_fallthru
    _
  // Predicated region
  $region6: #{ffc_resnet_block.10} parent=0 // pred_check
    _
  $region7: #{ffc_resnet_block.10} parent=0 // pred_check_branch
    %12 = sbr.rel (0) target = $region9
  $region8: #{ffc_resnet_block.10} parent=0 // pred_region
    _
  $region9: #{ffc_resnet_block.10} parent=0 // pred_fallthru
    _
  // Predicated region
  $region10: #{ffc_resnet_block.10} parent=0 // pred_check
    _
  $region11: #{ffc_resnet_block.10} parent=0 // pred_check_branch
    %14 = sbr.rel (0) target = $region13
  $region12: #{ffc_resnet_block.10} parent=0 // pred_region
    _
  $region13: #{ffc_resnet_block.10} parent=0 // pred_fallthru
    _
  // Predicated region
  $region14: #{ffc_resnet_block.10} parent=0 // pred_check
    _
  $region15: #{ffc_resnet_block.10} parent=0 // pred_check_branch
    %16 = sbr.rel (0) target = $region17
  $region16: #{ffc_resnet_block.10} parent=0 // pred_region
    _
  $region17: #{ffc_resnet_block.10} parent=0 // pred_fallthru
    _
  %v18 = vld [vmem:[%s1] sm:$0xff]
  %v19 = vld [vmem:[%s1 + $0x8] sm:$0xff]
  %v20 = vld [vmem:[%s1 + $0x10] sm:$0xff]
  %v21 = vld [vmem:[%s1 + $0x18] sm:$0xff]
  %v22 = vld [vmem:[%s1 + $0x20] sm:$0xff]
  %v23 = vld [vmem:[%s1 + $0x28] sm:$0xff]
  %v24 = vld [vmem:[%s1 + $0x30] sm:$0xff]
  %v25 = vld [vmem:[%s1 + $0x38] sm:$0xff]
  %v26 = vld [vmem:[%s1 + $0x40] sm:$0xff]
  %v27 = vld [vmem:[%s1 + $0x48] sm:$0xff]
  %v28 = vld [vmem:[%s1 + $0x50] sm:$0xff]
  %v29 = vld [vmem:[%s1 + $0x58] sm:$0xff]
  %v30 = vld [vmem:[%s1 + $0x60] sm:$0xff]
  %v31 = vld [vmem:[%s1 + $0x68] sm:$0xff]
  %v32 = vld [vmem:[%s1 + $0x70] sm:$0xff]
  %v33 = vld [vmem:[%s1 + $0x78] sm:$0xff]
  %v34 = vld [vmem:[%s1 + $0x80] sm:$0xff]
  %v35 = vld [vmem:[%s1 + $0x88] sm:$0xff]
  %v36 = vld [vmem:[%s1 + $0x90] sm:$0xff]
  %v37 = vld [vmem:[%s1 + $0x98] sm:$0xff]
  %v38 = vld [vmem:[%s1 + $0xa0] sm:$0xff]
  %v39 = vld [vmem:[%s1 + $0xa8] sm:$0xff]
  %v40 = vld [vmem:[%s1 + $0xb0] sm:$0xff]
  %v41 = vld [vmem:[%s1 + $0xb8] sm:$0xff]
  %v42 = vld [vmem:[%s1 + $0xc0] sm:$0xff]
  %v43 = vld [vmem:[%s1 + $0xc8] sm:$0xff]
  %v44 = vld [vmem:[%s1 + $0xd0] sm:$0xff]
  %v45 = vld [vmem:[%s1 + $0xd8] sm:$0xff]
  %v46 = vld [vmem:[%s1 + $0xe0] sm:$0xff]
  %v47 = vld [vmem:[%s1 + $0xe8] sm:$0xff]
  %v48 = vld [vmem:[%s1 + $0xf0] sm:$0xff]
  %v49 = vld [vmem:[%s1 + $0xf8] sm:$0xff]
  %v50 = vld [vmem:[%s1 + $0x100] sm:$0xff]
  %v51 = vld [vmem:[%s1 + $0x108] sm:$0xff]
  %v52 = vld [vmem:[%s1 + $0x110] sm:$0xff]
  %v53 = vld [vmem:[%s1 + $0x118] sm:$0xff]
  %v54 = vld [vmem:[%s0] sm:$0xff]
  %v55 = vld [vmem:[%s0 + $0x8] sm:$0xff]
  %v56 = vld [vmem:[%s2] sm:$0xff]
  %v57 = vld [vmem:[%s2 + $0x8] sm:$0xff]
  %59 = vset.pattern.permute.xlu0 0
  %60 = vperm.xlu0 %59, %v56
  %v61 = vpop.permute.xlu0 %60
  %64 = vset.pattern.permute.xlu0 0
  %65 = vperm.xlu0 %64, %v57
  %v66 = vpop.permute.xlu0 %65
  %v70 = vunpack.c.l.b16 %v54
  %v71 = vunpack.c.h.b16 %v54
  %v72 = vunpack.c.l.b16 %v55
  %v73 = vunpack.c.h.b16 %v55
  %v74 = vpack.c.b16 %v72, %v70
  %v75 = vpack.c.b16 %v73, %v71
  %v113 = vunpack.c.l.b16 %v18
  %v114 = vunpack.c.h.b16 %v18
  %v115 = vunpack.c.l.b16 %v19
  %v116 = vunpack.c.h.b16 %v19
  %v117 = vunpack.c.l.b16 %v20
  %v118 = vunpack.c.h.b16 %v20
  %v119 = vunpack.c.l.b16 %v21
  %v120 = vunpack.c.h.b16 %v21
  %v121 = vunpack.c.l.b16 %v22
  %v122 = vunpack.c.h.b16 %v22
  %v123 = vunpack.c.l.b16 %v23
  %v124 = vunpack.c.h.b16 %v23
  %v125 = vunpack.c.l.b16 %v24
  %v126 = vunpack.c.h.b16 %v24
  %v127 = vunpack.c.l.b16 %v25
  %v128 = vunpack.c.h.b16 %v25
  %v129 = vunpack.c.l.b16 %v26
  %v130 = vunpack.c.h.b16 %v26
  %v131 = vunpack.c.l.b16 %v27
  %v132 = vunpack.c.h.b16 %v27
  %v133 = vunpack.c.l.b16 %v28
  %v134 = vunpack.c.h.b16 %v28
  %v135 = vunpack.c.l.b16 %v29
  %v136 = vunpack.c.h.b16 %v29
  %v137 = vunpack.c.l.b16 %v30
  %v138 = vunpack.c.h.b16 %v30
  %v139 = vunpack.c.l.b16 %v31
  %v140 = vunpack.c.h.b16 %v31
  %v141 = vunpack.c.l.b16 %v32
  %v142 = vunpack.c.h.b16 %v32
  %v143 = vunpack.c.l.b16 %v33
  %v144 = vunpack.c.h.b16 %v33
  %v145 = vunpack.c.l.b16 %v34
  %v146 = vunpack.c.h.b16 %v34
  %v147 = vunpack.c.l.b16 %v35
  %v148 = vunpack.c.h.b16 %v35
  %v149 = vunpack.c.l.b16 %v36
  %v150 = vunpack.c.h.b16 %v36
  %v151 = vunpack.c.l.b16 %v37
  %v152 = vunpack.c.h.b16 %v37
  %v153 = vunpack.c.l.b16 %v38
  %v154 = vunpack.c.h.b16 %v38
  %v155 = vunpack.c.l.b16 %v39
  %v156 = vunpack.c.h.b16 %v39
  %v157 = vunpack.c.l.b16 %v40
  %v158 = vunpack.c.h.b16 %v40
  %v159 = vunpack.c.l.b16 %v41
  %v160 = vunpack.c.h.b16 %v41
  %v161 = vunpack.c.l.b16 %v42
  %v162 = vunpack.c.h.b16 %v42
  %v163 = vunpack.c.l.b16 %v43
  %v164 = vunpack.c.h.b16 %v43
  %v165 = vunpack.c.l.b16 %v44
  %v166 = vunpack.c.h.b16 %v44
  %v167 = vunpack.c.l.b16 %v45
  %v168 = vunpack.c.h.b16 %v45
  %v169 = vunpack.c.l.b16 %v46
  %v170 = vunpack.c.h.b16 %v46
  %v171 = vunpack.c.l.b16 %v47
  %v172 = vunpack.c.h.b16 %v47
  %v173 = vunpack.c.l.b16 %v48
  %v174 = vunpack.c.h.b16 %v48
  %v175 = vunpack.c.l.b16 %v49
  %v176 = vunpack.c.h.b16 %v49
  %v177 = vunpack.c.l.b16 %v50
  %v178 = vunpack.c.h.b16 %v50
  %v179 = vunpack.c.l.b16 %v51
  %v180 = vunpack.c.h.b16 %v51
  %v181 = vunpack.c.l.b16 %v52
  %v182 = vunpack.c.h.b16 %v52
  %v183 = vunpack.c.l.b16 %v53
  %v184 = vunpack.c.h.b16 %v53
  %v185 = vpack.c.b16 %v117, %v113
  %v186 = vpack.c.b16 %v118, %v114
  %v187 = vpack.c.b16 %v119, %v115
  %v188 = vpack.c.b16 %v120, %v116
  %v189 = vpack.c.b16 %v125, %v121
  %v190 = vpack.c.b16 %v126, %v122
  %v191 = vpack.c.b16 %v127, %v123
  %v192 = vpack.c.b16 %v128, %v124
  %v193 = vpack.c.b16 %v133, %v129
  %v194 = vpack.c.b16 %v134, %v130
  %v195 = vpack.c.b16 %v135, %v131
  %v196 = vpack.c.b16 %v136, %v132
  %v197 = vpack.c.b16 %v141, %v137
  %v198 = vpack.c.b16 %v142, %v138
  %v199 = vpack.c.b16 %v143, %v139
  %v200 = vpack.c.b16 %v144, %v140
  %v201 = vpack.c.b16 %v149, %v145
  %v202 = vpack.c.b16 %v150, %v146
  %v203 = vpack.c.b16 %v151, %v147
  %v204 = vpack.c.b16 %v152, %v148
  %v205 = vpack.c.b16 %v157, %v153
  %v206 = vpack.c.b16 %v158, %v154
  %v207 = vpack.c.b16 %v159, %v155
  %v208 = vpack.c.b16 %v160, %v156
  %v209 = vpack.c.b16 %v165, %v161
  %v210 = vpack.c.b16 %v166, %v162
  %v211 = vpack.c.b16 %v167, %v163
  %v212 = vpack.c.b16 %v168, %v164
  %v213 = vpack.c.b16 %v173, %v169
  %v214 = vpack.c.b16 %v174, %v170
  %v215 = vpack.c.b16 %v175, %v171
  %v216 = vpack.c.b16 %v176, %v172
  %v217 = vpack.c.b16 %v181, %v177
  %v218 = vpack.c.b16 %v182, %v178
  %v219 = vpack.c.b16 %v183, %v179
  %v220 = vpack.c.b16 %v184, %v180
  %vm257 = vcmask 130048
  %v259 = vsel %vm257, %v75, 0
  %261 = vmatprep.subr.bf16.mxu0 %v186
  %262 = vmatpush1.bf16.msra.mxu0 %v185
  %263 = vmatprep.subr.bf16.mxu0 %v190
  %264 = vmatpush1.bf16.msra.mxu0 %v189
  %265 = vmatprep.subr.bf16.mxu0 %v194
  %266 = vmatpush1.bf16.msra.mxu0 %v193
  %267 = vmatprep.subr.bf16.mxu0 %v198
  %268 = vmatpush1.bf16.msra.mxu0 %v197
  %269 = vmatprep.subr.bf16.mxu0 %v202
  %270 = vmatpush1.bf16.msra.mxu0 %v201
  %271 = vmatprep.subr.bf16.mxu0 %v206
  %272 = vmatpush1.bf16.msra.mxu0 %v205
  %273 = vmatprep.subr.bf16.mxu0 %v210
  %274 = vmatpush1.bf16.msra.mxu0 %v209
  %275 = vmatprep.subr.bf16.mxu0 %v214
  %276 = vmatpush1.bf16.msra.mxu0 %v213
  %277 = vmatprep.subr.bf16.mxu0 %v218
  %278 = vmatpush1.bf16.msra.mxu0 %v217
  %279 = vmatprep.subr.bf16.mxu0 0
  %280 = vmatpush1.bf16.msra.mxu0 0
  %281 = vmatprep.subr.bf16.mxu0 0
  %282 = vmatpush1.bf16.msra.mxu0 0
  %283 = vmatprep.subr.bf16.mxu0 0
  %284 = vmatpush1.bf16.msra.mxu0 0
  %285 = vmatprep.subr.bf16.mxu0 0
  %286 = vmatpush1.bf16.msra.mxu0 0
  %287 = vmatprep.subr.bf16.mxu0 0
  %288 = vmatpush1.bf16.msra.mxu0 0
  %289 = vmatprep.subr.bf16.mxu0 0
  %290 = vmatpush1.bf16.msra.mxu0 0
  %291 = vmatprep.subr.bf16.mxu0 0
  %292 = vmatpush1.bf16.msra.mxu0 0
  %293 = vmatprep.mubr.bf16.mxu0 %v259
  %294 = vmatmul.mubr.bf16.gmra.mrb[0].mxu0 %v74
  %v295 = vpop.f32.mrb[0].mxu0
  %v296 = vadd.f32 %v61, %v295
  %v297 = vpop.f32.mrb[0].mxu0
  %v298 = vadd.f32 %v61, %v297
  %v299 = vpop.f32.mrb[0].mxu0
  %v300 = vadd.f32 %v66, %v299
  %v301 = vpop.f32.mrb[0].mxu0
  %v302 = vadd.f32 %v66, %v301
  %303 = vdwg.mxu0
  %304 = vmatprep.subr.bf16.mxu0 %v188
  %305 = vmatpush1.bf16.msra.mxu0 %v187
  %306 = vmatprep.subr.bf16.mxu0 %v192
  %307 = vmatpush1.bf16.msra.mxu0 %v191
  %308 = vmatprep.subr.bf16.mxu0 %v196
  %309 = vmatpush1.bf16.msra.mxu0 %v195
  %310 = vmatprep.subr.bf16.mxu0 %v200
  %311 = vmatpush1.bf16.msra.mxu0 %v199
  %312 = vmatprep.subr.bf16.mxu0 %v204
  %313 = vmatpush1.bf16.msra.mxu0 %v203
  %314 = vmatprep.subr.bf16.mxu0 %v208
  %315 = vmatpush1.bf16.msra.mxu0 %v207
  %316 = vmatprep.subr.bf16.mxu0 %v212
  %317 = vmatpush1.bf16.msra.mxu0 %v211
  %318 = vmatprep.subr.bf16.mxu0 %v216
  %319 = vmatpush1.bf16.msra.mxu0 %v215
  %320 = vmatprep.subr.bf16.mxu0 %v220
  %321 = vmatpush1.bf16.msra.mxu0 %v219
  %322 = vmatprep.subr.bf16.mxu0 0
  %323 = vmatpush1.bf16.msra.mxu0 0
  %324 = vmatprep.subr.bf16.mxu0 0
  %325 = vmatpush1.bf16.msra.mxu0 0
  %326 = vmatprep.subr.bf16.mxu0 0
  %327 = vmatpush1.bf16.msra.mxu0 0
  %328 = vmatprep.subr.bf16.mxu0 0
  %329 = vmatpush1.bf16.msra.mxu0 0
  %330 = vmatprep.subr.bf16.mxu0 0
  %331 = vmatpush1.bf16.msra.mxu0 0
  %332 = vmatprep.subr.bf16.mxu0 0
  %333 = vmatpush1.bf16.msra.mxu0 0
  %334 = vmatprep.subr.bf16.mxu0 0
  %335 = vmatpush1.bf16.msra.mxu0 0
  %336 = vmatprep.mubr.bf16.mxu0 %v259
  %337 = vmatmul.mubr.bf16.gmra.mrb[0].mxu0 %v74
  %v338 = vpop.f32.mrb[0].mxu0
  %v339 = vadd.f32 %v61, %v338
  %v340 = vpop.f32.mrb[0].mxu0
  %v341 = vadd.f32 %v61, %v340
  %v342 = vpop.f32.mrb[0].mxu0
  %v343 = vadd.f32 %v66, %v342
  %v344 = vpop.f32.mrb[0].mxu0
  %v345 = vadd.f32 %v66, %v344
  %346 = vdwg.mxu0
  %v347 = vld [vmem:[%s3] sm:$0xff]
  %v348 = vld [vmem:[%s3 + $0x8] sm:$0xff]
  %350 = vset.pattern.permute.xlu0 0
  %351 = vperm.xlu0 %350, %v347
  %v352 = vpop.permute.xlu0 %351
  %355 = vset.pattern.permute.xlu0 0
  %356 = vperm.xlu0 %355, %v348
  %v357 = vpop.permute.xlu0 %356
  %v359 = vmax.f32 %v296, %v352
  %v360 = vmax.f32 %v298, %v352
  %v361 = vmax.f32 %v339, %v352
  %v362 = vmax.f32 %v341, %v352
  %v363 = vmax.f32 %v300, %v357
  %v364 = vmax.f32 %v302, %v357
  %v365 = vmax.f32 %v343, %v357
  %v366 = vmax.f32 %v345, %v357
  %367 = vst [vmem:[%s4] sm:$0xff] %v359
  %368 = vst [vmem:[%s4 + $0x8] sm:$0xff] %v360
  %369 = vst [vmem:[%s4 + $0x10] sm:$0xff] %v361
  %370 = vst [vmem:[%s4 + $0x18] sm:$0xff] %v362
  %371 = vst [vmem:[%s4 + $0x20] sm:$0xff] %v363
  %372 = vst [vmem:[%s4 + $0x28] sm:$0xff] %v364
  %373 = vst [vmem:[%s4 + $0x30] sm:$0xff] %v365
  %374 = vst [vmem:[%s4 + $0x38] sm:$0xff] %v366
  // Predicated region
  $region18: #{ffc_resnet_block.10} parent=0 // pred_check
    _
  $region19: #{ffc_resnet_block.10} parent=0 // pred_check_branch
    %376 = sbr.rel (0) target = $region21
  $region20: #{ffc_resnet_block.10} parent=0 // pred_region
    _
  $region21: #{ffc_resnet_block.10} parent=0 // pred_fallthru
    _
  // Predicated region
  $region22: #{ffc_resnet_block.10} parent=0 // pred_check
    _
  $region23: #{ffc_resnet_block.10} parent=0 // pred_check_branch
    %378 = sbr.rel (0) target = $region25
  $region24: #{ffc_resnet_block.10} parent=0 // pred_region
    _
  $region25: #{ffc_resnet_block.10} parent=0 // pred_fallthru
    _

// kernel: ffc_resnet_block.14
$region0: #{ffc_resnet_block.14}
  #allocation0 [shape = 'u32[]', space=smem, size = 0x4, offset = 0x4, fixed_abs, tag = 'smem constant byte address 0x4 - core index']
  #allocation1 [shape = 'u32[144,128]{1,0:T(1,128)}', space=vmem, size = 0x12000, scoped, tag = 'internal scratch']
  %s0 = inlined_call_operand.vmem [shape: bf16[8,4], index: 0, kind: input, shape index: {}]
  %s1 = inlined_call_operand.vmem [shape: bf16[4,512], index: 1, kind: input, shape index: {}]
  %s2 = inlined_call_operand.vmem [shape: bf16[4,512], index: 2, kind: input, shape index: {}]
  %s3 = inlined_call_operand.vmem [shape: bf16[4,512], index: 3, kind: input, shape index: {}]
  %s4 = inlined_call_operand.vmem [shape: f32[8,512], index: 4, kind: input, shape index: {}]
  %s5 = inlined_call_operand.vmem [shape: f32[8,1], index: 5, kind: input, shape index: {}]
  %s6 = inlined_call_operand.vmem [shape: f32[8,1], index: 6, kind: input, shape index: {}]
  %s7 = inlined_call_operand.vmem [shape: f32[8,512], index: 7, kind: output, shape index: {}]
  %s8 = sld [smem:[#allocation0]]
  $region38: #{ffc_resnet_block.14} parent=0
    _
  %s10 = ssub.s32 1, %s8
  %s11 = scalar_select 0, %s10, %s8
  // Predicated region
  $region2: #{ffc_resnet_block.14} parent=0 // pred_check
    _
  $region3: #{ffc_resnet_block.14} parent=0 // pred_check_branch
    %13 = sbr.rel (0) target = $region5
  $region4: #{ffc_resnet_block.14} parent=0 // pred_region
    _
  $region5: #{ffc_resnet_block.14} parent=0 // pred_fallthru
    _
  // Predicated region
  $region6: #{ffc_resnet_block.14} parent=0 // pred_check
    _
  $region7: #{ffc_resnet_block.14} parent=0 // pred_check_branch
    %15 = sbr.rel (0) target = $region9
  $region8: #{ffc_resnet_block.14} parent=0 // pred_region
    _
  $region9: #{ffc_resnet_block.14} parent=0 // pred_fallthru
    _
  // Predicated region
  $region10: #{ffc_resnet_block.14} parent=0 // pred_check
    _
  $region11: #{ffc_resnet_block.14} parent=0 // pred_check_branch
    %17 = sbr.rel (0) target = $region13
  $region12: #{ffc_resnet_block.14} parent=0 // pred_region
    _
  $region13: #{ffc_resnet_block.14} parent=0 // pred_fallthru
    _
  // Predicated region
  $region14: #{ffc_resnet_block.14} parent=0 // pred_check
    _
  $region15: #{ffc_resnet_block.14} parent=0 // pred_check_branch
    %19 = sbr.rel (0) target = $region17
  $region16: #{ffc_resnet_block.14} parent=0 // pred_region
    _
  $region17: #{ffc_resnet_block.14} parent=0 // pred_fallthru
    _
  // Predicated region
  $region18: #{ffc_resnet_block.14} parent=0 // pred_check
    _
  $region19: #{ffc_resnet_block.14} parent=0 // pred_check_branch
    %21 = sbr.rel (0) target = $region21
  $region20: #{ffc_resnet_block.14} parent=0 // pred_region
    _
  $region21: #{ffc_resnet_block.14} parent=0 // pred_fallthru
    _
  // Predicated region
  $region22: #{ffc_resnet_block.14} parent=0 // pred_check
    _
  $region23: #{ffc_resnet_block.14} parent=0 // pred_check_branch
    %23 = sbr.rel (0) target = $region25
  $region24: #{ffc_resnet_block.14} parent=0 // pred_region
    _
  $region25: #{ffc_resnet_block.14} parent=0 // pred_fallthru
    _
  // Predicated region
  $region26: #{ffc_resnet_block.14} parent=0 // pred_check
    _
  $region27: #{ffc_resnet_block.14} parent=0 // pred_check_branch
    %25 = sbr.rel (0) target = $region29
  $region28: #{ffc_resnet_block.14} parent=0 // pred_region
    _
  $region29: #{ffc_resnet_block.14} parent=0 // pred_fallthru
    _
  %v27 = vld [vmem:[%s1] sm:$0xff]
  %v28 = vld [vmem:[%s2] sm:$0xff]
  %v29 = vadd.bf16 %v27, %v28
  %v30 = vld [vmem:[%s3] sm:$0xff]
  %v31 = vadd.bf16 %v29, %v30
  %v32 = vld [vmem:[%s0] sm:$0xf]
  %v33 = vld [vmem:[%s4] sm:$0xff]
  %v34 = vld [vmem:[%s4 + $0x8] sm:$0xff]
  %v35 = vld [vmem:[%s4 + $0x10] sm:$0xff]
  %v36 = vld [vmem:[%s4 + $0x18] sm:$0xff]
  %v38 = vcombine.high %v31, %v31
  %v40 = vunpack.c.l.s4 1983009808
  %v41 = vunpack.c.0.s8 %v40
  %v42 = vlaneseq
  %v43 = vshrl.u32 %v42, 7
  %v44 = vsub.s32 %v41, %v43
  %v45 = vrot.slane %v31, %v44
  %v47 = vunpack.c.l.s4 1983009808
  %v48 = vunpack.c.0.s8 %v47
  %v49 = vlaneseq
  %v50 = vshrl.u32 %v49, 7
  %v51 = vsub.s32 %v48, %v50
  %v52 = vrot.slane %v38, %v51
  %v53 = vcombine.high %v45, %v45
  %v54 = vcombine.high %v52, %v52
  %vm55 = vcmask 31744
  %v57 = vsel %vm55, %v32, 0
  %vm59 = vcmask 1041408
  %v61 = vsel %vm59, %v45, 0
  %v64 = vsel %vm59, %v53, 0
  %v67 = vsel %vm59, %v52, 0
  %v70 = vsel %vm59, %v54, 0
  %72 = vmatprep.subr.bf16.mxu0 %v64
  %73 = vmatpush1.bf16.msra.mxu0 %v61
  %74 = vmatprep.subr.bf16.mxu0 0
  %75 = vmatpush1.bf16.msra.mxu0 0
  %76 = vmatprep.subr.bf16.mxu0 0
  %77 = vmatpush1.bf16.msra.mxu0 0
  %78 = vmatprep.subr.bf16.mxu0 0
  %79 = vmatpush1.bf16.msra.mxu0 0
  %80 = vmatprep.subr.bf16.mxu0 0
  %81 = vmatpush1.bf16.msra.mxu0 0
  %82 = vmatprep.subr.bf16.mxu0 0
  %83 = vmatpush1.bf16.msra.mxu0 0
  %84 = vmatprep.subr.bf16.mxu0 0
  %85 = vmatpush1.bf16.msra.mxu0 0
  %86 = vmatprep.subr.bf16.mxu0 0
  %87 = vmatpush1.bf16.msra.mxu0 0
  %88 = vmatprep.subr.bf16.mxu0 0
  %89 = vmatpush1.bf16.msra.mxu0 0
  %90 = vmatprep.subr.bf16.mxu0 0
  %91 = vmatpush1.bf16.msra.mxu0 0
  %92 = vmatprep.subr.bf16.mxu0 0
  %93 = vmatpush1.bf16.msra.mxu0 0
  %94 = vmatprep.subr.bf16.mxu0 0
  %95 = vmatpush1.bf16.msra.mxu0 0
  %96 = vmatprep.subr.bf16.mxu0 0
  %97 = vmatpush1.bf16.msra.mxu0 0
  %98 = vmatprep.subr.bf16.mxu0 0
  %99 = vmatpush1.bf16.msra.mxu0 0
  %100 = vmatprep.subr.bf16.mxu0 0
  %101 = vmatpush1.bf16.msra.mxu0 0
  %102 = vmatprep.subr.bf16.mxu0 0
  %103 = vmatpush1.bf16.msra.mxu0 0
  %104 = vmatprep.mubr.bf16.mxu0 0
  %105 = vmatmul.mubr.bf16.gmra.mrb[0].mxu0 %v57
  %v106 = vpop.f32.mrb[0].mxu0
  %v107 = vadd.f32 %v33, %v106
  %v108 = vpop.f32.mrb[0].mxu0
  %v109 = vadd.f32 %v34, %v108
  %v110 = vpop.f32.mrb[0].mxu0
  %v111 = vpop.f32.mrb[0].mxu0
  %112 = vdwg.mxu0
  %113 = vmatprep.subr.bf16.mxu0 %v70
  %114 = vmatpush1.bf16.msra.mxu0 %v67
  %115 = vmatprep.subr.bf16.mxu0 0
  %116 = vmatpush1.bf16.msra.mxu0 0
  %117 = vmatprep.subr.bf16.mxu0 0
  %118 = vmatpush1.bf16.msra.mxu0 0
  %119 = vmatprep.subr.bf16.mxu0 0
  %120 = vmatpush1.bf16.msra.mxu0 0
  %121 = vmatprep.subr.bf16.mxu0 0
  %122 = vmatpush1.bf16.msra.mxu0 0
  %123 = vmatprep.subr.bf16.mxu0 0
  %124 = vmatpush1.bf16.msra.mxu0 0
  %125 = vmatprep.subr.bf16.mxu0 0
  %126 = vmatpush1.bf16.msra.mxu0 0
  %127 = vmatprep.subr.bf16.mxu0 0
  %128 = vmatpush1.bf16.msra.mxu0 0
  %129 = vmatprep.subr.bf16.mxu0 0
  %130 = vmatpush1.bf16.msra.mxu0 0
  %131 = vmatprep.subr.bf16.mxu0 0
  %132 = vmatpush1.bf16.msra.mxu0 0
  %133 = vmatprep.subr.bf16.mxu0 0
  %134 = vmatpush1.bf16.msra.mxu0 0
  %135 = vmatprep.subr.bf16.mxu0 0
  %136 = vmatpush1.bf16.msra.mxu0 0
  %137 = vmatprep.subr.bf16.mxu0 0
  %138 = vmatpush1.bf16.msra.mxu0 0
  %139 = vmatprep.subr.bf16.mxu0 0
  %140 = vmatpush1.bf16.msra.mxu0 0
  %141 = vmatprep.subr.bf16.mxu0 0
  %142 = vmatpush1.bf16.msra.mxu0 0
  %143 = vmatprep.subr.bf16.mxu0 0
  %144 = vmatpush1.bf16.msra.mxu0 0
  %145 = vmatprep.mubr.bf16.mxu0 0
  %146 = vmatmul.mubr.bf16.gmra.mrb[0].mxu0 %v57
  %v147 = vpop.f32.mrb[0].mxu0
  %v148 = vadd.f32 %v35, %v147
  %v149 = vpop.f32.mrb[0].mxu0
  %v150 = vadd.f32 %v36, %v149
  %v151 = vpop.f32.mrb[0].mxu0
  %v152 = vpop.f32.mrb[0].mxu0
  %153 = vdwg.mxu0
  %v154 = vld [vmem:[%s5] sm:$0xff]
  %156 = vset.pattern.permute.xlu0 0
  %157 = vperm.xlu0 %156, %v154
  %v158 = vpop.permute.xlu0 %157
  %v160 = vadd.f32 %v107, %v158
  %v161 = vadd.f32 %v109, %v158
  %v162 = vadd.f32 %v148, %v158
  %v163 = vadd.f32 %v150, %v158
  %v164 = vld [vmem:[%s6] sm:$0xff]
  %166 = vset.pattern.permute.xlu0 0
  %167 = vperm.xlu0 %166, %v164
  %v168 = vpop.permute.xlu0 %167
  %v170 = vmax.f32 %v160, %v168
  %v171 = vmax.f32 %v161, %v168
  %v172 = vmax.f32 %v162, %v168
  %v173 = vmax.f32 %v163, %v168
  %174 = vst [vmem:[%s7] sm:$0xff] %v170
  %175 = vst [vmem:[%s7 + $0x8] sm:$0xff] %v171
  %176 = vst [vmem:[%s7 + $0x10] sm:$0xff] %v172
  %177 = vst [vmem:[%s7 + $0x18] sm:$0xff] %v173
  // Predicated region
  $region30: #{ffc_resnet_block.14} parent=0 // pred_check
    _
  $region31: #{ffc_resnet_block.14} parent=0 // pred_check_branch
    %179 = sbr.rel (0) target = $region33
  $region32: #{ffc_resnet_block.14} parent=0 // pred_region
    _
  $region33: #{ffc_resnet_block.14} parent=0 // pred_fallthru
    _
  // Predicated region
  $region34: #{ffc_resnet_block.14} parent=0 // pred_check
    _
  $region35: #{ffc_resnet_block.14} parent=0 // pred_check_branch
    %181 = sbr.rel (0) target = $region37
  $region36: #{ffc_resnet_block.14} parent=0 // pred_region
    _
  $region37: #{ffc_resnet_block.14} parent=0 // pred_fallthru
    _

// kernel: ffc_resnet_block.16
$region0: #{ffc_resnet_block.16}
  #allocation0 [shape = 'u32[]', space=smem, size = 0x4, offset = 0x4, fixed_abs, tag = 'smem constant byte address 0x4 - core index']
  #allocation1 [shape = 'u32[144,128]{1,0:T(1,128)}', space=vmem, size = 0x12000, scoped, tag = 'internal scratch']
  %s0 = inlined_call_operand.vmem [shape: bf16[4,8], index: 0, kind: input, shape index: {}]
  %s1 = inlined_call_operand.vmem [shape: bf16[8,512], index: 1, kind: input, shape index: {}]
  %s2 = inlined_call_operand.vmem [shape: f32[4,1], index: 2, kind: input, shape index: {}]
  %s3 = inlined_call_operand.vmem [shape: f32[4,1], index: 3, kind: input, shape index: {}]
  %s4 = inlined_call_operand.vmem [shape: f32[4,512], index: 4, kind: output, shape index: {}]
  %s5 = sld [smem:[#allocation0]]
  $region26: #{ffc_resnet_block.16} parent=0
    _
  %s7 = ssub.s32 1, %s5
  %s8 = scalar_select 0, %s7, %s5
  // Predicated region
  $region2: #{ffc_resnet_block.16} parent=0 // pred_check
    _
  $region3: #{ffc_resnet_block.16} parent=0 // pred_check_branch
    %10 = sbr.rel (0) target = $region5
  $region4: #{ffc_resnet_block.16} parent=0 // pred_region
    _
  $region5: #{ffc_resnet_block.16} parent=0 // pred_fallthru
    _
  // Predicated region
  $region6: #{ffc_resnet_block.16} parent=0 // pred_check
    _
  $region7: #{ffc_resnet_block.16} parent=0 // pred_check_branch
    %12 = sbr.rel (0) target = $region9
  $region8: #{ffc_resnet_block.16} parent=0 // pred_region
    _
  $region9: #{ffc_resnet_block.16} parent=0 // pred_fallthru
    _
  // Predicated region
  $region10: #{ffc_resnet_block.16} parent=0 // pred_check
    _
  $region11: #{ffc_resnet_block.16} parent=0 // pred_check_branch
    %14 = sbr.rel (0) target = $region13
  $region12: #{ffc_resnet_block.16} parent=0 // pred_region
    _
  $region13: #{ffc_resnet_block.16} parent=0 // pred_fallthru
    _
  // Predicated region
  $region14: #{ffc_resnet_block.16} parent=0 // pred_check
    _
  $region15: #{ffc_resnet_block.16} parent=0 // pred_check_branch
    %16 = sbr.rel (0) target = $region17
  $region16: #{ffc_resnet_block.16} parent=0 // pred_region
    _
  $region17: #{ffc_resnet_block.16} parent=0 // pred_fallthru
    _
  %v18 = vld [vmem:[%s1] sm:$0xff]
  %v19 = vld [vmem:[%s1 + $0x8] sm:$0xff]
  %v20 = vld [vmem:[%s0] sm:$0x3]
  %v21 = vld [vmem:[%s2] sm:$0xf]
  %23 = vset.pattern.permute.xlu0 0
  %24 = vperm.xlu0 %23, %v21
  %v25 = vpop.permute.xlu0 %24
  %v29 = vunpack.c.l.b16 %v18
  %v30 = vunpack.c.h.b16 %v18
  %v31 = vunpack.c.l.b16 %v19
  %v32 = vunpack.c.h.b16 %v19
  %v33 = vpack.c.b16 %v29, %v29
  %v34 = vpack.c.b16 %v30, %v30
  %v35 = vpack.c.b16 %v31, %v31
  %v36 = vpack.c.b16 %v32, %v32
  %vm37 = vcmask 64512
  %v39 = vsel %vm37, %v20, 0
  %vm41 = vcmask 1043456
  %v43 = vsel %vm41, %v33, 0
  %v46 = vsel %vm41, %v34, 0
  %v49 = vsel %vm41, %v35, 0
  %v52 = vsel %vm41, %v36, 0
  %54 = vmatprep.subr.bf16.mxu0 %v46
  %55 = vmatpush1.bf16.msra.mxu0 %v43
  %56 = vmatprep.subr.bf16.mxu0 0
  %57 = vmatpush1.bf16.msra.mxu0 0
  %58 = vmatprep.subr.bf16.mxu0 0
  %59 = vmatpush1.bf16.msra.mxu0 0
  %60 = vmatprep.subr.bf16.mxu0 0
  %61 = vmatpush1.bf16.msra.mxu0 0
  %62 = vmatprep.subr.bf16.mxu0 0
  %63 = vmatpush1.bf16.msra.mxu0 0
  %64 = vmatprep.subr.bf16.mxu0 0
  %65 = vmatpush1.bf16.msra.mxu0 0
  %66 = vmatprep.subr.bf16.mxu0 0
  %67 = vmatpush1.bf16.msra.mxu0 0
  %68 = vmatprep.subr.bf16.mxu0 0
  %69 = vmatpush1.bf16.msra.mxu0 0
  %70 = vmatprep.subr.bf16.mxu0 0
  %71 = vmatpush1.bf16.msra.mxu0 0
  %72 = vmatprep.subr.bf16.mxu0 0
  %73 = vmatpush1.bf16.msra.mxu0 0
  %74 = vmatprep.subr.bf16.mxu0 0
  %75 = vmatpush1.bf16.msra.mxu0 0
  %76 = vmatprep.subr.bf16.mxu0 0
  %77 = vmatpush1.bf16.msra.mxu0 0
  %78 = vmatprep.subr.bf16.mxu0 0
  %79 = vmatpush1.bf16.msra.mxu0 0
  %80 = vmatprep.subr.bf16.mxu0 0
  %81 = vmatpush1.bf16.msra.mxu0 0
  %82 = vmatprep.subr.bf16.mxu0 0
  %83 = vmatpush1.bf16.msra.mxu0 0
  %84 = vmatprep.subr.bf16.mxu0 0
  %85 = vmatpush1.bf16.msra.mxu0 0
  %86 = vmatprep.mubr.bf16.mxu0 0
  %87 = vmatmul.mubr.bf16.gmra.mrb[0].mxu0 %v39
  %v88 = vpop.f32.mrb[0].mxu0
  %v89 = vadd.f32 %v25, %v88
  %v90 = vpop.f32.mrb[0].mxu0
  %v91 = vadd.f32 %v25, %v90
  %v92 = vpop.f32.mrb[0].mxu0
  %v93 = vpop.f32.mrb[0].mxu0
  %94 = vdwg.mxu0
  %95 = vmatprep.subr.bf16.mxu0 %v52
  %96 = vmatpush1.bf16.msra.mxu0 %v49
  %97 = vmatprep.subr.bf16.mxu0 0
  %98 = vmatpush1.bf16.msra.mxu0 0
  %99 = vmatprep.subr.bf16.mxu0 0
  %100 = vmatpush1.bf16.msra.mxu0 0
  %101 = vmatprep.subr.bf16.mxu0 0
  %102 = vmatpush1.bf16.msra.mxu0 0
  %103 = vmatprep.subr.bf16.mxu0 0
  %104 = vmatpush1.bf16.msra.mxu0 0
  %105 = vmatprep.subr.bf16.mxu0 0
  %106 = vmatpush1.bf16.msra.mxu0 0
  %107 = vmatprep.subr.bf16.mxu0 0
  %108 = vmatpush1.bf16.msra.mxu0 0
  %109 = vmatprep.subr.bf16.mxu0 0
  %110 = vmatpush1.bf16.msra.mxu0 0
  %111 = vmatprep.subr.bf16.mxu0 0
  %112 = vmatpush1.bf16.msra.mxu0 0
  %113 = vmatprep.subr.bf16.mxu0 0
  %114 = vmatpush1.bf16.msra.mxu0 0
  %115 = vmatprep.subr.bf16.mxu0 0
  %116 = vmatpush1.bf16.msra.mxu0 0
  %117 = vmatprep.subr.bf16.mxu0 0
  %118 = vmatpush1.bf16.msra.mxu0 0
  %119 = vmatprep.subr.bf16.mxu0 0
  %120 = vmatpush1.bf16.msra.mxu0 0
  %121 = vmatprep.subr.bf16.mxu0 0
  %122 = vmatpush1.bf16.msra.mxu0 0
  %123 = vmatprep.subr.bf16.mxu0 0
  %124 = vmatpush1.bf16.msra.mxu0 0
  %125 = vmatprep.subr.bf16.mxu0 0
  %126 = vmatpush1.bf16.msra.mxu0 0
  %127 = vmatprep.mubr.bf16.mxu0 0
  %128 = vmatmul.mubr.bf16.gmra.mrb[0].mxu0 %v39
  %v129 = vpop.f32.mrb[0].mxu0
  %v130 = vadd.f32 %v25, %v129
  %v131 = vpop.f32.mrb[0].mxu0
  %v132 = vadd.f32 %v25, %v131
  %v133 = vpop.f32.mrb[0].mxu0
  %v134 = vpop.f32.mrb[0].mxu0
  %135 = vdwg.mxu0
  %v136 = vld [vmem:[%s3] sm:$0xf]
  %138 = vset.pattern.permute.xlu0 0
  %139 = vperm.xlu0 %138, %v136
  %v140 = vpop.permute.xlu0 %139
  %v142 = vmax.f32 %v89, %v140
  %v143 = vmax.f32 %v91, %v140
  %v144 = vmax.f32 %v130, %v140
  %v145 = vmax.f32 %v132, %v140
  %v150 = vcombine.low %v142, %v143
  %v151 = vcombine.low %v144, %v145
  %154 = vst [vmem:[%s4] sm:$0xff] %v150
  %155 = vst [vmem:[%s4 + $0x8] sm:$0xff] %v151
  // Predicated region
  $region18: #{ffc_resnet_block.16} parent=0 // pred_check
    _
  $region19: #{ffc_resnet_block.16} parent=0 // pred_check_branch
    %157 = sbr.rel (0) target = $region21
  $region20: #{ffc_resnet_block.16} parent=0 // pred_region
    _
  $region21: #{ffc_resnet_block.16} parent=0 // pred_fallthru
    _
  // Predicated region
  $region22: #{ffc_resnet_block.16} parent=0 // pred_check
    _
  $region23: #{ffc_resnet_block.16} parent=0 // pred_check_branch
    %159 = sbr.rel (0) target = $region25
  $region24: #{ffc_resnet_block.16} parent=0 // pred_region
    _
  $region25: #{ffc_resnet_block.16} parent=0 // pred_fallthru
    _

</llo_original>
